<compile_context>
chip_gen: v7x
topology: tpu7x:2x2x1
jax: 0.10.0
libtpu: 0.0.40
codegen_flags: <defaults>
</compile_context>

<pallas_src>
import jax
import jax.numpy as jnp
from jax import lax
from jax.experimental import pallas as pl
from jax.experimental.pallas import tpu as pltpu


def bilstm_kernel(x_ref,
                  wih_ref, whh_ref, b_ref,
                  wemb_ref, bemb_ref,
                  out_ref,
                  gx_scr, h_scr):
    T, Bb, nIn = x_ref.shape          # Bb is the per-grid-step batch block (multiple of 8)
    H = whh_ref.shape[0] // 2
    nOut = bemb_ref.shape[-1]

    wih = wih_ref[...]                # (nIn, 8H)  fused fwd|bwd input weights, (i,f,o,g) order
    whh = whh_ref[...]                # (2H, 8H)   block-diagonal recurrence weights
    wemb = wemb_ref[...]              # (2H, nOut) fused output projection

    # ---------------- Phase 1: single large input-projection GEMM ----------------
    # gx[t] = x_t @ [W_ih_f | W_ih_b] + [b_f | b_b], computed for every t at once.
    x_flat = x_ref[...].reshape(T * Bb, nIn).astype(wih.dtype)
    gx = jnp.dot(x_flat, wih, preferred_element_type=jnp.float32) + b_ref[...]
    gx_scr[...] = gx.reshape(T, Bb, 8 * H)

    def gate_math(g, c_prev):
        # Gate columns are (i, f, o, g): one contiguous sigmoid over 3H lanes,
        # tanh over the last H. All gate math stays in f32.
        sig = jax.nn.sigmoid(g[:, 0:3 * H])
        i = sig[:, 0:H]
        f = sig[:, H:2 * H]
        o = sig[:, 2 * H:3 * H]
        cand = jnp.tanh(g[:, 3 * H:4 * H])
        c = f * c_prev + i * cand
        h = o * jnp.tanh(c)
        return h, c

    # ------- Phase 2: interleaved fwd/bwd recurrence, state in registers -------
    def step(idx, carry):
        h_cat, c_f, c_b = carry            # h_cat = [h_f | h_b]  (Bb, 2H)
        t_b = T - 1 - idx
        # Single block-diagonal MXU push per step for both directions.
        gh = jnp.dot(h_cat.astype(whh.dtype), whh,
                     preferred_element_type=jnp.float32)          # (Bb, 8H)
        g_f = gx_scr[idx][:, 0:4 * H] + gh[:, 0:4 * H]
        g_b = gx_scr[t_b][:, 4 * H:8 * H] + gh[:, 4 * H:8 * H]
        h_f, c_f = gate_math(g_f, c_f)
        h_b, c_b = gate_math(g_b, c_b)
        # Pack both directions lane-dense into one scratch: [h_f | h_b].
        h_scr[idx, :, 0:H] = h_f
        h_scr[t_b, :, H:2 * H] = h_b
        return (jnp.concatenate([h_f, h_b], axis=-1), c_f, c_b)

    z1 = jnp.zeros((Bb, H), jnp.float32)
    z2 = jnp.zeros((Bb, 2 * H), jnp.float32)
    # Full unroll only while T is small; partial unroll keeps LLO visibility
    # without blowing up vreg pressure / compile time at production T.
    lax.fori_loop(0, T, step, (z2, z1, z1), unroll=True if T <= 16 else 8)

    # ---------------- Phase 3: single fused output-projection GEMM ----------------
    h_flat = h_scr[...].reshape(T * Bb, 2 * H).astype(wemb.dtype)
    y = jnp.dot(h_flat, wemb, preferred_element_type=jnp.float32) + bemb_ref[...]
    out_ref[...] = y.reshape(T, Bb, nOut).astype(out_ref.dtype)


def _reorder_ifgo_to_ifog(w):
    """Permute the 4H gate columns from PyTorch order (i, f, g, o) to (i, f, o, g)."""
    H = w.shape[-1] // 4
    return jnp.concatenate(
        [w[..., 0:2 * H], w[..., 3 * H:4 * H], w[..., 2 * H:3 * H]], axis=-1)


def bidirectional_lstm(x, params, *, batch_blocks=1, mxu_dtype=jnp.float32):
    """x: (T, B, nIn) f32 -> (T, B, nOut) f32.

    params use PyTorch gate order (i, f, g, o), weights pre-transposed for
    right-matmul; b_* fuses b_ih + b_hh.

    batch_blocks: 1 on single-TensorCore chips (v5e/v6e); 2 on v7x so the
      "parallel" batch axis shards across both TensorCores.
    mxu_dtype: jnp.bfloat16 on v6e/v7x hits MXU bf16 peak and halves weight
      VMEM traffic (gate math and accumulation stay f32); f32 here for exact
      validation against the reference.
    """
    T, B, nIn = x.shape
    H = params["whh_f"].shape[0]
    nOut = params["wemb_f"].shape[1]

    # --- wrapper-side weight fusion / gate permutation (one-time) ---
    wih_fb = jnp.concatenate([_reorder_ifgo_to_ifog(params["wih_f"]),
                              _reorder_ifgo_to_ifog(params["wih_b"])],
                             axis=1).astype(mxu_dtype)                   # (nIn, 8H)
    b_fb = jnp.concatenate([_reorder_ifgo_to_ifog(params["b_f"]),
                            _reorder_ifgo_to_ifog(params["b_b"])], axis=1)  # (1, 8H)
    whh_blk = jnp.zeros((2 * H, 8 * H), jnp.float32)
    whh_blk = whh_blk.at[0:H, 0:4 * H].set(_reorder_ifgo_to_ifog(params["whh_f"]))
    whh_blk = whh_blk.at[H:2 * H, 4 * H:8 * H].set(_reorder_ifgo_to_ifog(params["whh_b"]))
    whh_blk = whh_blk.astype(mxu_dtype)                                  # (2H, 8H)
    wemb_fb = jnp.concatenate([params["wemb_f"], params["wemb_b"]],
                              axis=0).astype(mxu_dtype)                  # (2H, nOut)
    bemb = params["bemb"]                                                # (1, nOut)

    # Pad batch to a sublane multiple so in-kernel flatten/reshape are
    # layout-preserving and all stores are sublane-aligned.
    B_pad = -(-B // 8) * 8
    if B_pad != B:
        x = jnp.pad(x, ((0, 0), (0, B_pad - B), (0, 0)))
    assert B_pad % batch_blocks == 0
    block_b = B_pad // batch_blocks
    assert block_b % 8 == 0

    grid_spec = pltpu.PrefetchScalarGridSpec(
        num_scalar_prefetch=0,
        grid=(batch_blocks,),
        in_specs=[
            pl.BlockSpec((T, block_b, nIn), lambda b: (0, b, 0)),   # x
            pl.BlockSpec((nIn, 8 * H), lambda b: (0, 0)),           # wih_fb
            pl.BlockSpec((2 * H, 8 * H), lambda b: (0, 0)),         # whh_blk
            pl.BlockSpec((1, 8 * H), lambda b: (0, 0)),             # b_fb
            pl.BlockSpec((2 * H, nOut), lambda b: (0, 0)),          # wemb_fb
            pl.BlockSpec((1, nOut), lambda b: (0, 0)),              # bemb
        ],
        out_specs=pl.BlockSpec((T, block_b, nOut), lambda b: (0, b, 0)),
        scratch_shapes=[
            pltpu.VMEM((T, block_b, 8 * H), jnp.float32),   # fused input projections
            pltpu.VMEM((T, block_b, 2 * H), jnp.float32),   # packed [h_f | h_b] states
        ],
    )
    # TODO(synk): for long T / large batches on v7x (64 MiB VMEM), raise
    # vmem_limit_bytes via CompilerParams or chunk T with an 'arbitrary' grid
    # axis carrying (h, c) in scratch across chunks.

    out = pl.pallas_call(
        bilstm_kernel,
        out_shape=jax.ShapeDtypeStruct((T, B_pad, nOut), jnp.float32),
        grid_spec=grid_spec,
        compiler_params=pltpu.CompilerParams(
            dimension_semantics=("parallel",)),
    )(x, wih_fb, whh_blk, b_fb, wemb_fb, bemb)
    return out[:, :B]


# ----------------------------- pure-JAX reference -----------------------------
def _lstm_dir_ref(x, wih, whh, b, reverse):
    T, B, _ = x.shape
    H = whh.shape[0]

    def step(carry, x_t):
        h, c = carry
        gates = x_t @ wih + h @ whh + b[0]
        i = jax.nn.sigmoid(gates[:, 0 * H:1 * H])
        f = jax.nn.sigmoid(gates[:, 1 * H:2 * H])
        g = jnp.tanh(gates[:, 2 * H:3 * H])
        o = jax.nn.sigmoid(gates[:, 3 * H:4 * H])
        c = f * c + i * g
        h = o * jnp.tanh(c)
        return (h, c), h

    xs = x[::-1] if reverse else x
    init = (jnp.zeros((B, H), jnp.float32), jnp.zeros((B, H), jnp.float32))
    _, hs = lax.scan(step, init, xs)
    return hs[::-1] if reverse else hs


def bidirectional_lstm_ref(x, p):
    h_f = _lstm_dir_ref(x, p["wih_f"], p["whh_f"], p["b_f"], reverse=False)
    h_b = _lstm_dir_ref(x, p["wih_b"], p["whh_b"], p["b_b"], reverse=True)
    rec = jnp.concatenate([h_f, h_b], axis=-1)          # (T, B, 2H)
    return rec @ jnp.concatenate([p["wemb_f"], p["wemb_b"]], axis=0) + p["bemb"][0]


# ----------------------------------- main -----------------------------------
if __name__ == "__main__":
    T, B, nIn, H, nOut = 8, 2, 16, 32, 8   # 4H = 128 -> lane-aligned gate blocks

    key = jax.random.PRNGKey(0)
    ks = jax.random.split(key, 11)
    scale = 1.0 / jnp.sqrt(jnp.float32(H))

    def u(k, shape):
        return jax.random.uniform(k, shape, jnp.float32, -scale, scale)

    # Gate order (i, f, g, o) as in PyTorch, weights pre-transposed for
    # right-matmul. b_* combines PyTorch's b_ih + b_hh.
    params = {
        "wih_f":  u(ks[0], (nIn, 4 * H)),
        "whh_f":  u(ks[1], (H, 4 * H)),
        "b_f":    u(ks[2], (1, 4 * H)),
        "wih_b":  u(ks[3], (nIn, 4 * H)),
        "whh_b":  u(ks[4], (H, 4 * H)),
        "b_b":    u(ks[5], (1, 4 * H)),
        "wemb_f": u(ks[6], (H, nOut)),      # top half of Linear(2H, nOut) weight.T
        "wemb_b": u(ks[7], (H, nOut)),      # bottom half
        "bemb":   u(ks[8], (1, nOut)),
    }

    x = jax.random.normal(ks[9], (T, B, nIn), jnp.float32)

    out = jax.block_until_ready(bidirectional_lstm(x, params))
    ref = jax.block_until_ready(bidirectional_lstm_ref(x, params))

    assert out.shape == (T, B, nOut)
    assert jnp.max(jnp.abs(out - ref)) < 1e-4, "Pallas output mismatch vs JAX reference"

    print("KERNEL_OK")
</pallas_src>

<mosaic_0001>
module attributes {stable_mosaic.version = 11 : i64} {
  func.func @bilstm_kernel(%arg0: i32, %arg1: memref<8x8x16xf32, #tpu.memory_space<vmem>>, %arg2: memref<16x256xf32, #tpu.memory_space<vmem>>, %arg3: memref<64x256xf32, #tpu.memory_space<vmem>>, %arg4: memref<1x256xf32, #tpu.memory_space<vmem>>, %arg5: memref<64x8xf32, #tpu.memory_space<vmem>>, %arg6: memref<1x8xf32, #tpu.memory_space<vmem>>, %arg7: memref<8x8x8xf32, #tpu.memory_space<vmem>>, %arg8: memref<8x8x256xf32, #tpu.memory_space<vmem>>, %arg9: memref<8x8x64xf32, #tpu.memory_space<vmem>>) attributes {dimension_semantics = [#tpu.dimension_semantics<parallel>], iteration_bounds = array<i64: 1>, scalar_prefetch = 0 : i64, scratch_operands = 2 : i64, tpu.core_type = #tpu.core_type<tc>, window_params = [{transform_indices = @transform_0, window_bounds = array<i64: 8, 8, 16>}, {pipeline_mode = #tpu.pipeline_mode<synchronous>, transform_indices = @transform_1, window_bounds = array<i64: 16, 256>}, {pipeline_mode = #tpu.pipeline_mode<synchronous>, transform_indices = @transform_2, window_bounds = array<i64: 64, 256>}, {pipeline_mode = #tpu.pipeline_mode<synchronous>, transform_indices = @transform_3, window_bounds = array<i64: 1, 256>}, {pipeline_mode = #tpu.pipeline_mode<synchronous>, transform_indices = @transform_4, window_bounds = array<i64: 64, 8>}, {pipeline_mode = #tpu.pipeline_mode<synchronous>, transform_indices = @transform_5, window_bounds = array<i64: 1, 8>}, {transform_indices = @transform_6, window_bounds = array<i64: 8, 8, 8>}]} {
    %c0 = arith.constant 0 : index
    %c0_0 = arith.constant 0 : index
    %0 = vector.load %arg2[%c0, %c0_0] : memref<16x256xf32, #tpu.memory_space<vmem>>, vector<16x256xf32>
    %c0_1 = arith.constant 0 : index
    %c0_2 = arith.constant 0 : index
    %1 = vector.load %arg3[%c0_1, %c0_2] : memref<64x256xf32, #tpu.memory_space<vmem>>, vector<64x256xf32>
    %c0_3 = arith.constant 0 : index
    %c0_4 = arith.constant 0 : index
    %2 = vector.load %arg5[%c0_3, %c0_4] : memref<64x8xf32, #tpu.memory_space<vmem>>, vector<64x8xf32>
    %c0_5 = arith.constant 0 : index
    %c0_6 = arith.constant 0 : index
    %c0_7 = arith.constant 0 : index
    %3 = vector.load %arg1[%c0_5, %c0_6, %c0_7] : memref<8x8x16xf32, #tpu.memory_space<vmem>>, vector<8x8x16xf32>
    %4 = vector.shape_cast %3 : vector<8x8x16xf32> to vector<64x16xf32>
    %cst = arith.constant dense<0.000000e+00> : vector<64x256xf32>
    %5 = tpu.matmul %4, %0, %cst {dimension_numbers = #tpu.dot_dimension_numbers<[1], [0], [0], [1], [0, 0, 1, 1], [], []>} : vector<64x16xf32>, vector<16x256xf32>, vector<64x256xf32> -> vector<64x256xf32>
    %c0_8 = arith.constant 0 : index
    %c0_9 = arith.constant 0 : index
    %6 = vector.load %arg4[%c0_8, %c0_9] : memref<1x256xf32, #tpu.memory_space<vmem>>, vector<1x256xf32>
    %7 = vector.broadcast %6 : vector<1x256xf32> to vector<64x256xf32>
    %8 = arith.addf %5, %7 : vector<64x256xf32>
    %9 = vector.shape_cast %8 : vector<64x256xf32> to vector<8x8x256xf32>
    %c0_10 = arith.constant 0 : index
    %c0_11 = arith.constant 0 : index
    %c0_12 = arith.constant 0 : index
    %10 = vector.load %arg8[%c0_10, %c0_11, %c0_12] : memref<8x8x256xf32, #tpu.memory_space<vmem>>, vector<8x8x256xf32>
    tpu.vector_store %arg8[%c0_10, %c0_11, %c0_12], %9 {strides = array<i32>} : memref<8x8x256xf32, #tpu.memory_space<vmem>>, vector<8x8x256xf32>,
    %cst_13 = arith.constant 0.000000e+00 : f32
    %11 = vector.broadcast %cst_13 : f32 to vector<8x32xf32>
    %cst_14 = arith.constant 0.000000e+00 : f32
    %12 = vector.broadcast %cst_14 : f32 to vector<8x64xf32>
    %c0_i32 = arith.constant 0 : i32
    %c7_i32 = arith.constant 7 : i32
    %13 = arith.subi %c7_i32, %c0_i32 : i32
    %cst_15 = arith.constant dense<0.000000e+00> : vector<8x256xf32>
    %14 = tpu.matmul %12, %1, %cst_15 {dimension_numbers = #tpu.dot_dimension_numbers<[1], [0], [0], [1], [0, 0, 1, 1], [], []>} : vector<8x64xf32>, vector<64x256xf32>, vector<8x256xf32> -> vector<8x256xf32>
    %15 = arith.index_cast %c0_i32 : i32 to index
    %c0_16 = arith.constant 0 : index
    %c0_17 = arith.constant 0 : index
    %16 = vector.load %arg8[%15, %c0_16, %c0_17] : memref<8x8x256xf32, #tpu.memory_space<vmem>>, vector<1x8x256xf32>
    %17 = vector.shape_cast %16 : vector<1x8x256xf32> to vector<8x256xf32>
    %18 = vector.extract_strided_slice %17 {offsets = [0, 0], sizes = [8, 128], strides = [1, 1]} : vector<8x256xf32> to vector<8x128xf32>
    %19 = vector.extract_strided_slice %14 {offsets = [0, 0], sizes = [8, 128], strides = [1, 1]} : vector<8x256xf32> to vector<8x128xf32>
    %20 = arith.addf %18, %19 : vector<8x128xf32>
    %21 = arith.index_cast %13 : i32 to index
    %c0_18 = arith.constant 0 : index
    %c0_19 = arith.constant 0 : index
    %22 = vector.load %arg8[%21, %c0_18, %c0_19] : memref<8x8x256xf32, #tpu.memory_space<vmem>>, vector<1x8x256xf32>
    %23 = vector.shape_cast %22 : vector<1x8x256xf32> to vector<8x256xf32>
    %24 = vector.extract_strided_slice %23 {offsets = [0, 128], sizes = [8, 128], strides = [1, 1]} : vector<8x256xf32> to vector<8x128xf32>
    %25 = vector.extract_strided_slice %14 {offsets = [0, 128], sizes = [8, 128], strides = [1, 1]} : vector<8x256xf32> to vector<8x128xf32>
    %26 = arith.addf %24, %25 : vector<8x128xf32>
    %27 = vector.extract_strided_slice %20 {offsets = [0, 0], sizes = [8, 96], strides = [1, 1]} : vector<8x128xf32> to vector<8x96xf32>
    %28 = arith.negf %27 : vector<8x96xf32>
    %29 = math.exp %28 : vector<8x96xf32>
    %cst_20 = arith.constant 1.000000e+00 : f32
    %30 = vector.broadcast %cst_20 : f32 to vector<8x96xf32>
    %31 = arith.addf %30, %29 : vector<8x96xf32>
    %32 = arith.divf %30, %31 : vector<8x96xf32>
    %33 = vector.extract_strided_slice %32 {offsets = [0, 0], sizes = [8, 32], strides = [1, 1]} : vector<8x96xf32> to vector<8x32xf32>
    %34 = vector.extract_strided_slice %32 {offsets = [0, 32], sizes = [8, 32], strides = [1, 1]} : vector<8x96xf32> to vector<8x32xf32>
    %35 = vector.extract_strided_slice %32 {offsets = [0, 64], sizes = [8, 32], strides = [1, 1]} : vector<8x96xf32> to vector<8x32xf32>
    %36 = vector.extract_strided_slice %20 {offsets = [0, 96], sizes = [8, 32], strides = [1, 1]} : vector<8x128xf32> to vector<8x32xf32>
    %37 = math.tanh %36 : vector<8x32xf32>
    %38 = arith.mulf %34, %11 : vector<8x32xf32>
    %39 = arith.mulf %33, %37 : vector<8x32xf32>
    %40 = arith.addf %38, %39 : vector<8x32xf32>
    %41 = math.tanh %40 : vector<8x32xf32>
    %42 = arith.mulf %35, %41 : vector<8x32xf32>
    %43 = vector.extract_strided_slice %26 {offsets = [0, 0], sizes = [8, 96], strides = [1, 1]} : vector<8x128xf32> to vector<8x96xf32>
    %44 = arith.negf %43 : vector<8x96xf32>
    %45 = math.exp %44 : vector<8x96xf32>
    %cst_21 = arith.constant 1.000000e+00 : f32
    %46 = vector.broadcast %cst_21 : f32 to vector<8x96xf32>
    %47 = arith.addf %46, %45 : vector<8x96xf32>
    %48 = arith.divf %46, %47 : vector<8x96xf32>
    %49 = vector.extract_strided_slice %48 {offsets = [0, 0], sizes = [8, 32], strides = [1, 1]} : vector<8x96xf32> to vector<8x32xf32>
    %50 = vector.extract_strided_slice %48 {offsets = [0, 32], sizes = [8, 32], strides = [1, 1]} : vector<8x96xf32> to vector<8x32xf32>
    %51 = vector.extract_strided_slice %48 {offsets = [0, 64], sizes = [8, 32], strides = [1, 1]} : vector<8x96xf32> to vector<8x32xf32>
    %52 = vector.extract_strided_slice %26 {offsets = [0, 96], sizes = [8, 32], strides = [1, 1]} : vector<8x128xf32> to vector<8x32xf32>
    %53 = math.tanh %52 : vector<8x32xf32>
    %54 = arith.mulf %50, %11 : vector<8x32xf32>
    %55 = arith.mulf %49, %53 : vector<8x32xf32>
    %56 = arith.addf %54, %55 : vector<8x32xf32>
    %57 = math.tanh %56 : vector<8x32xf32>
    %58 = arith.mulf %51, %57 : vector<8x32xf32>
    %59 = arith.index_cast %c0_i32 : i32 to index
    %c0_22 = arith.constant 0 : index
    %c0_23 = arith.constant 0 : index
    %60 = vector.load %arg9[%59, %c0_22, %c0_23] : memref<8x8x64xf32, #tpu.memory_space<vmem>>, vector<1x8x32xf32>
    %61 = vector.shape_cast %60 : vector<1x8x32xf32> to vector<8x32xf32>
    %62 = vector.shape_cast %42 : vector<8x32xf32> to vector<1x8x32xf32>
    tpu.vector_store %arg9[%59, %c0_22, %c0_23], %62 {strides = array<i32>} : memref<8x8x64xf32, #tpu.memory_space<vmem>>, vector<1x8x32xf32>,
    %63 = arith.index_cast %13 : i32 to index
    %c0_24 = arith.constant 0 : index
    %c32 = arith.constant 32 : index
    %64 = vector.load %arg9[%63, %c0_24, %c32] : memref<8x8x64xf32, #tpu.memory_space<vmem>>, vector<1x8x32xf32>
    %65 = vector.shape_cast %64 : vector<1x8x32xf32> to vector<8x32xf32>
    %66 = vector.shape_cast %58 : vector<8x32xf32> to vector<1x8x32xf32>
    tpu.vector_store %arg9[%63, %c0_24, %c32], %66 {strides = array<i32>} : memref<8x8x64xf32, #tpu.memory_space<vmem>>, vector<1x8x32xf32>,
    %67 = tpu.concatenate %42, %58 in 1 : vector<8x32xf32>, vector<8x32xf32> -> vector<8x64xf32>
    %c1_i32 = arith.constant 1 : i32
    %c7_i32_25 = arith.constant 7 : i32
    %68 = arith.subi %c7_i32_25, %c1_i32 : i32
    %cst_26 = arith.constant dense<0.000000e+00> : vector<8x256xf32>
    %69 = tpu.matmul %67, %1, %cst_26 {dimension_numbers = #tpu.dot_dimension_numbers<[1], [0], [0], [1], [0, 0, 1, 1], [], []>} : vector<8x64xf32>, vector<64x256xf32>, vector<8x256xf32> -> vector<8x256xf32>
    %70 = arith.index_cast %c1_i32 : i32 to index
    %c0_27 = arith.constant 0 : index
    %c0_28 = arith.constant 0 : index
    %71 = vector.load %arg8[%70, %c0_27, %c0_28] : memref<8x8x256xf32, #tpu.memory_space<vmem>>, vector<1x8x256xf32>
    %72 = vector.shape_cast %71 : vector<1x8x256xf32> to vector<8x256xf32>
    %73 = vector.extract_strided_slice %72 {offsets = [0, 0], sizes = [8, 128], strides = [1, 1]} : vector<8x256xf32> to vector<8x128xf32>
    %74 = vector.extract_strided_slice %69 {offsets = [0, 0], sizes = [8, 128], strides = [1, 1]} : vector<8x256xf32> to vector<8x128xf32>
    %75 = arith.addf %73, %74 : vector<8x128xf32>
    %76 = arith.index_cast %68 : i32 to index
    %c0_29 = arith.constant 0 : index
    %c0_30 = arith.constant 0 : index
    %77 = vector.load %arg8[%76, %c0_29, %c0_30] : memref<8x8x256xf32, #tpu.memory_space<vmem>>, vector<1x8x256xf32>
    %78 = vector.shape_cast %77 : vector<1x8x256xf32> to vector<8x256xf32>
    %79 = vector.extract_strided_slice %78 {offsets = [0, 128], sizes = [8, 128], strides = [1, 1]} : vector<8x256xf32> to vector<8x128xf32>
    %80 = vector.extract_strided_slice %69 {offsets = [0, 128], sizes = [8, 128], strides = [1, 1]} : vector<8x256xf32> to vector<8x128xf32>
    %81 = arith.addf %79, %80 : vector<8x128xf32>
    %82 = vector.extract_strided_slice %75 {offsets = [0, 0], sizes = [8, 96], strides = [1, 1]} : vector<8x128xf32> to vector<8x96xf32>
    %83 = arith.negf %82 : vector<8x96xf32>
    %84 = math.exp %83 : vector<8x96xf32>
    %cst_31 = arith.constant 1.000000e+00 : f32
    %85 = vector.broadcast %cst_31 : f32 to vector<8x96xf32>
    %86 = arith.addf %85, %84 : vector<8x96xf32>
    %87 = arith.divf %85, %86 : vector<8x96xf32>
    %88 = vector.extract_strided_slice %87 {offsets = [0, 0], sizes = [8, 32], strides = [1, 1]} : vector<8x96xf32> to vector<8x32xf32>
    %89 = vector.extract_strided_slice %87 {offsets = [0, 32], sizes = [8, 32], strides = [1, 1]} : vector<8x96xf32> to vector<8x32xf32>
    %90 = vector.extract_strided_slice %87 {offsets = [0, 64], sizes = [8, 32], strides = [1, 1]} : vector<8x96xf32> to vector<8x32xf32>
    %91 = vector.extract_strided_slice %75 {offsets = [0, 96], sizes = [8, 32], strides = [1, 1]} : vector<8x128xf32> to vector<8x32xf32>
    %92 = math.tanh %91 : vector<8x32xf32>
    %93 = arith.mulf %89, %40 : vector<8x32xf32>
    %94 = arith.mulf %88, %92 : vector<8x32xf32>
    %95 = arith.addf %93, %94 : vector<8x32xf32>
    %96 = math.tanh %95 : vector<8x32xf32>
    %97 = arith.mulf %90, %96 : vector<8x32xf32>
    %98 = vector.extract_strided_slice %81 {offsets = [0, 0], sizes = [8, 96], strides = [1, 1]} : vector<8x128xf32> to vector<8x96xf32>
    %99 = arith.negf %98 : vector<8x96xf32>
    %100 = math.exp %99 : vector<8x96xf32>
    %cst_32 = arith.constant 1.000000e+00 : f32
    %101 = vector.broadcast %cst_32 : f32 to vector<8x96xf32>
    %102 = arith.addf %101, %100 : vector<8x96xf32>
    %103 = arith.divf %101, %102 : vector<8x96xf32>
    %104 = vector.extract_strided_slice %103 {offsets = [0, 0], sizes = [8, 32], strides = [1, 1]} : vector<8x96xf32> to vector<8x32xf32>
    %105 = vector.extract_strided_slice %103 {offsets = [0, 32], sizes = [8, 32], strides = [1, 1]} : vector<8x96xf32> to vector<8x32xf32>
    %106 = vector.extract_strided_slice %103 {offsets = [0, 64], sizes = [8, 32], strides = [1, 1]} : vector<8x96xf32> to vector<8x32xf32>
    %107 = vector.extract_strided_slice %81 {offsets = [0, 96], sizes = [8, 32], strides = [1, 1]} : vector<8x128xf32> to vector<8x32xf32>
    %108 = math.tanh %107 : vector<8x32xf32>
    %109 = arith.mulf %105, %56 : vector<8x32xf32>
    %110 = arith.mulf %104, %108 : vector<8x32xf32>
    %111 = arith.addf %109, %110 : vector<8x32xf32>
    %112 = math.tanh %111 : vector<8x32xf32>
    %113 = arith.mulf %106, %112 : vector<8x32xf32>
    %114 = arith.index_cast %c1_i32 : i32 to index
    %c0_33 = arith.constant 0 : index
    %c0_34 = arith.constant 0 : index
    %115 = vector.load %arg9[%114, %c0_33, %c0_34] : memref<8x8x64xf32, #tpu.memory_space<vmem>>, vector<1x8x32xf32>
    %116 = vector.shape_cast %115 : vector<1x8x32xf32> to vector<8x32xf32>
    %117 = vector.shape_cast %97 : vector<8x32xf32> to vector<1x8x32xf32>
    tpu.vector_store %arg9[%114, %c0_33, %c0_34], %117 {strides = array<i32>} : memref<8x8x64xf32, #tpu.memory_space<vmem>>, vector<1x8x32xf32>,
    %118 = arith.index_cast %68 : i32 to index
    %c0_35 = arith.constant 0 : index
    %c32_36 = arith.constant 32 : index
    %119 = vector.load %arg9[%118, %c0_35, %c32_36] : memref<8x8x64xf32, #tpu.memory_space<vmem>>, vector<1x8x32xf32>
    %120 = vector.shape_cast %119 : vector<1x8x32xf32> to vector<8x32xf32>
    %121 = vector.shape_cast %113 : vector<8x32xf32> to vector<1x8x32xf32>
    tpu.vector_store %arg9[%118, %c0_35, %c32_36], %121 {strides = array<i32>} : memref<8x8x64xf32, #tpu.memory_space<vmem>>, vector<1x8x32xf32>,
    %122 = tpu.concatenate %97, %113 in 1 : vector<8x32xf32>, vector<8x32xf32> -> vector<8x64xf32>
    %c2_i32 = arith.constant 2 : i32
    %c7_i32_37 = arith.constant 7 : i32
    %123 = arith.subi %c7_i32_37, %c2_i32 : i32
    %cst_38 = arith.constant dense<0.000000e+00> : vector<8x256xf32>
    %124 = tpu.matmul %122, %1, %cst_38 {dimension_numbers = #tpu.dot_dimension_numbers<[1], [0], [0], [1], [0, 0, 1, 1], [], []>} : vector<8x64xf32>, vector<64x256xf32>, vector<8x256xf32> -> vector<8x256xf32>
    %125 = arith.index_cast %c2_i32 : i32 to index
    %c0_39 = arith.constant 0 : index
    %c0_40 = arith.constant 0 : index
    %126 = vector.load %arg8[%125, %c0_39, %c0_40] : memref<8x8x256xf32, #tpu.memory_space<vmem>>, vector<1x8x256xf32>
    %127 = vector.shape_cast %126 : vector<1x8x256xf32> to vector<8x256xf32>
    %128 = vector.extract_strided_slice %127 {offsets = [0, 0], sizes = [8, 128], strides = [1, 1]} : vector<8x256xf32> to vector<8x128xf32>
    %129 = vector.extract_strided_slice %124 {offsets = [0, 0], sizes = [8, 128], strides = [1, 1]} : vector<8x256xf32> to vector<8x128xf32>
    %130 = arith.addf %128, %129 : vector<8x128xf32>
    %131 = arith.index_cast %123 : i32 to index
    %c0_41 = arith.constant 0 : index
    %c0_42 = arith.constant 0 : index
    %132 = vector.load %arg8[%131, %c0_41, %c0_42] : memref<8x8x256xf32, #tpu.memory_space<vmem>>, vector<1x8x256xf32>
    %133 = vector.shape_cast %132 : vector<1x8x256xf32> to vector<8x256xf32>
    %134 = vector.extract_strided_slice %133 {offsets = [0, 128], sizes = [8, 128], strides = [1, 1]} : vector<8x256xf32> to vector<8x128xf32>
    %135 = vector.extract_strided_slice %124 {offsets = [0, 128], sizes = [8, 128], strides = [1, 1]} : vector<8x256xf32> to vector<8x128xf32>
    %136 = arith.addf %134, %135 : vector<8x128xf32>
    %137 = vector.extract_strided_slice %130 {offsets = [0, 0], sizes = [8, 96], strides = [1, 1]} : vector<8x128xf32> to vector<8x96xf32>
    %138 = arith.negf %137 : vector<8x96xf32>
    %139 = math.exp %138 : vector<8x96xf32>
    %cst_43 = arith.constant 1.000000e+00 : f32
    %140 = vector.broadcast %cst_43 : f32 to vector<8x96xf32>
    %141 = arith.addf %140, %139 : vector<8x96xf32>
    %142 = arith.divf %140, %141 : vector<8x96xf32>
    %143 = vector.extract_strided_slice %142 {offsets = [0, 0], sizes = [8, 32], strides = [1, 1]} : vector<8x96xf32> to vector<8x32xf32>
    %144 = vector.extract_strided_slice %142 {offsets = [0, 32], sizes = [8, 32], strides = [1, 1]} : vector<8x96xf32> to vector<8x32xf32>
    %145 = vector.extract_strided_slice %142 {offsets = [0, 64], sizes = [8, 32], strides = [1, 1]} : vector<8x96xf32> to vector<8x32xf32>
    %146 = vector.extract_strided_slice %130 {offsets = [0, 96], sizes = [8, 32], strides = [1, 1]} : vector<8x128xf32> to vector<8x32xf32>
    %147 = math.tanh %146 : vector<8x32xf32>
    %148 = arith.mulf %144, %95 : vector<8x32xf32>
    %149 = arith.mulf %143, %147 : vector<8x32xf32>
    %150 = arith.addf %148, %149 : vector<8x32xf32>
    %151 = math.tanh %150 : vector<8x32xf32>
    %152 = arith.mulf %145, %151 : vector<8x32xf32>
    %153 = vector.extract_strided_slice %136 {offsets = [0, 0], sizes = [8, 96], strides = [1, 1]} : vector<8x128xf32> to vector<8x96xf32>
    %154 = arith.negf %153 : vector<8x96xf32>
    %155 = math.exp %154 : vector<8x96xf32>
    %cst_44 = arith.constant 1.000000e+00 : f32
    %156 = vector.broadcast %cst_44 : f32 to vector<8x96xf32>
    %157 = arith.addf %156, %155 : vector<8x96xf32>
    %158 = arith.divf %156, %157 : vector<8x96xf32>
    %159 = vector.extract_strided_slice %158 {offsets = [0, 0], sizes = [8, 32], strides = [1, 1]} : vector<8x96xf32> to vector<8x32xf32>
    %160 = vector.extract_strided_slice %158 {offsets = [0, 32], sizes = [8, 32], strides = [1, 1]} : vector<8x96xf32> to vector<8x32xf32>
    %161 = vector.extract_strided_slice %158 {offsets = [0, 64], sizes = [8, 32], strides = [1, 1]} : vector<8x96xf32> to vector<8x32xf32>
    %162 = vector.extract_strided_slice %136 {offsets = [0, 96], sizes = [8, 32], strides = [1, 1]} : vector<8x128xf32> to vector<8x32xf32>
    %163 = math.tanh %162 : vector<8x32xf32>
    %164 = arith.mulf %160, %111 : vector<8x32xf32>
    %165 = arith.mulf %159, %163 : vector<8x32xf32>
    %166 = arith.addf %164, %165 : vector<8x32xf32>
    %167 = math.tanh %166 : vector<8x32xf32>
    %168 = arith.mulf %161, %167 : vector<8x32xf32>
    %169 = arith.index_cast %c2_i32 : i32 to index
    %c0_45 = arith.constant 0 : index
    %c0_46 = arith.constant 0 : index
    %170 = vector.load %arg9[%169, %c0_45, %c0_46] : memref<8x8x64xf32, #tpu.memory_space<vmem>>, vector<1x8x32xf32>
    %171 = vector.shape_cast %170 : vector<1x8x32xf32> to vector<8x32xf32>
    %172 = vector.shape_cast %152 : vector<8x32xf32> to vector<1x8x32xf32>
    tpu.vector_store %arg9[%169, %c0_45, %c0_46], %172 {strides = array<i32>} : memref<8x8x64xf32, #tpu.memory_space<vmem>>, vector<1x8x32xf32>,
    %173 = arith.index_cast %123 : i32 to index
    %c0_47 = arith.constant 0 : index
    %c32_48 = arith.constant 32 : index
    %174 = vector.load %arg9[%173, %c0_47, %c32_48] : memref<8x8x64xf32, #tpu.memory_space<vmem>>, vector<1x8x32xf32>
    %175 = vector.shape_cast %174 : vector<1x8x32xf32> to vector<8x32xf32>
    %176 = vector.shape_cast %168 : vector<8x32xf32> to vector<1x8x32xf32>
    tpu.vector_store %arg9[%173, %c0_47, %c32_48], %176 {strides = array<i32>} : memref<8x8x64xf32, #tpu.memory_space<vmem>>, vector<1x8x32xf32>,
    %177 = tpu.concatenate %152, %168 in 1 : vector<8x32xf32>, vector<8x32xf32> -> vector<8x64xf32>
    %c3_i32 = arith.constant 3 : i32
    %c7_i32_49 = arith.constant 7 : i32
    %178 = arith.subi %c7_i32_49, %c3_i32 : i32
    %cst_50 = arith.constant dense<0.000000e+00> : vector<8x256xf32>
    %179 = tpu.matmul %177, %1, %cst_50 {dimension_numbers = #tpu.dot_dimension_numbers<[1], [0], [0], [1], [0, 0, 1, 1], [], []>} : vector<8x64xf32>, vector<64x256xf32>, vector<8x256xf32> -> vector<8x256xf32>
    %180 = arith.index_cast %c3_i32 : i32 to index
    %c0_51 = arith.constant 0 : index
    %c0_52 = arith.constant 0 : index
    %181 = vector.load %arg8[%180, %c0_51, %c0_52] : memref<8x8x256xf32, #tpu.memory_space<vmem>>, vector<1x8x256xf32>
    %182 = vector.shape_cast %181 : vector<1x8x256xf32> to vector<8x256xf32>
    %183 = vector.extract_strided_slice %182 {offsets = [0, 0], sizes = [8, 128], strides = [1, 1]} : vector<8x256xf32> to vector<8x128xf32>
    %184 = vector.extract_strided_slice %179 {offsets = [0, 0], sizes = [8, 128], strides = [1, 1]} : vector<8x256xf32> to vector<8x128xf32>
    %185 = arith.addf %183, %184 : vector<8x128xf32>
    %186 = arith.index_cast %178 : i32 to index
    %c0_53 = arith.constant 0 : index
    %c0_54 = arith.constant 0 : index
    %187 = vector.load %arg8[%186, %c0_53, %c0_54] : memref<8x8x256xf32, #tpu.memory_space<vmem>>, vector<1x8x256xf32>
    %188 = vector.shape_cast %187 : vector<1x8x256xf32> to vector<8x256xf32>
    %189 = vector.extract_strided_slice %188 {offsets = [0, 128], sizes = [8, 128], strides = [1, 1]} : vector<8x256xf32> to vector<8x128xf32>
    %190 = vector.extract_strided_slice %179 {offsets = [0, 128], sizes = [8, 128], strides = [1, 1]} : vector<8x256xf32> to vector<8x128xf32>
    %191 = arith.addf %189, %190 : vector<8x128xf32>
    %192 = vector.extract_strided_slice %185 {offsets = [0, 0], sizes = [8, 96], strides = [1, 1]} : vector<8x128xf32> to vector<8x96xf32>
    %193 = arith.negf %192 : vector<8x96xf32>
    %194 = math.exp %193 : vector<8x96xf32>
    %cst_55 = arith.constant 1.000000e+00 : f32
    %195 = vector.broadcast %cst_55 : f32 to vector<8x96xf32>
    %196 = arith.addf %195, %194 : vector<8x96xf32>
    %197 = arith.divf %195, %196 : vector<8x96xf32>
    %198 = vector.extract_strided_slice %197 {offsets = [0, 0], sizes = [8, 32], strides = [1, 1]} : vector<8x96xf32> to vector<8x32xf32>
    %199 = vector.extract_strided_slice %197 {offsets = [0, 32], sizes = [8, 32], strides = [1, 1]} : vector<8x96xf32> to vector<8x32xf32>
    %200 = vector.extract_strided_slice %197 {offsets = [0, 64], sizes = [8, 32], strides = [1, 1]} : vector<8x96xf32> to vector<8x32xf32>
    %201 = vector.extract_strided_slice %185 {offsets = [0, 96], sizes = [8, 32], strides = [1, 1]} : vector<8x128xf32> to vector<8x32xf32>
    %202 = math.tanh %201 : vector<8x32xf32>
    %203 = arith.mulf %199, %150 : vector<8x32xf32>
    %204 = arith.mulf %198, %202 : vector<8x32xf32>
    %205 = arith.addf %203, %204 : vector<8x32xf32>
    %206 = math.tanh %205 : vector<8x32xf32>
    %207 = arith.mulf %200, %206 : vector<8x32xf32>
    %208 = vector.extract_strided_slice %191 {offsets = [0, 0], sizes = [8, 96], strides = [1, 1]} : vector<8x128xf32> to vector<8x96xf32>
    %209 = arith.negf %208 : vector<8x96xf32>
    %210 = math.exp %209 : vector<8x96xf32>
    %cst_56 = arith.constant 1.000000e+00 : f32
    %211 = vector.broadcast %cst_56 : f32 to vector<8x96xf32>
    %212 = arith.addf %211, %210 : vector<8x96xf32>
    %213 = arith.divf %211, %212 : vector<8x96xf32>
    %214 = vector.extract_strided_slice %213 {offsets = [0, 0], sizes = [8, 32], strides = [1, 1]} : vector<8x96xf32> to vector<8x32xf32>
    %215 = vector.extract_strided_slice %213 {offsets = [0, 32], sizes = [8, 32], strides = [1, 1]} : vector<8x96xf32> to vector<8x32xf32>
    %216 = vector.extract_strided_slice %213 {offsets = [0, 64], sizes = [8, 32], strides = [1, 1]} : vector<8x96xf32> to vector<8x32xf32>
    %217 = vector.extract_strided_slice %191 {offsets = [0, 96], sizes = [8, 32], strides = [1, 1]} : vector<8x128xf32> to vector<8x32xf32>
    %218 = math.tanh %217 : vector<8x32xf32>
    %219 = arith.mulf %215, %166 : vector<8x32xf32>
    %220 = arith.mulf %214, %218 : vector<8x32xf32>
    %221 = arith.addf %219, %220 : vector<8x32xf32>
    %222 = math.tanh %221 : vector<8x32xf32>
    %223 = arith.mulf %216, %222 : vector<8x32xf32>
    %224 = arith.index_cast %c3_i32 : i32 to index
    %c0_57 = arith.constant 0 : index
    %c0_58 = arith.constant 0 : index
    %225 = vector.load %arg9[%224, %c0_57, %c0_58] : memref<8x8x64xf32, #tpu.memory_space<vmem>>, vector<1x8x32xf32>
    %226 = vector.shape_cast %225 : vector<1x8x32xf32> to vector<8x32xf32>
    %227 = vector.shape_cast %207 : vector<8x32xf32> to vector<1x8x32xf32>
    tpu.vector_store %arg9[%224, %c0_57, %c0_58], %227 {strides = array<i32>} : memref<8x8x64xf32, #tpu.memory_space<vmem>>, vector<1x8x32xf32>,
    %228 = arith.index_cast %178 : i32 to index
    %c0_59 = arith.constant 0 : index
    %c32_60 = arith.constant 32 : index
    %229 = vector.load %arg9[%228, %c0_59, %c32_60] : memref<8x8x64xf32, #tpu.memory_space<vmem>>, vector<1x8x32xf32>
    %230 = vector.shape_cast %229 : vector<1x8x32xf32> to vector<8x32xf32>
    %231 = vector.shape_cast %223 : vector<8x32xf32> to vector<1x8x32xf32>
    tpu.vector_store %arg9[%228, %c0_59, %c32_60], %231 {strides = array<i32>} : memref<8x8x64xf32, #tpu.memory_space<vmem>>, vector<1x8x32xf32>,
    %232 = tpu.concatenate %207, %223 in 1 : vector<8x32xf32>, vector<8x32xf32> -> vector<8x64xf32>
    %c4_i32 = arith.constant 4 : i32
    %c7_i32_61 = arith.constant 7 : i32
    %233 = arith.subi %c7_i32_61, %c4_i32 : i32
    %cst_62 = arith.constant dense<0.000000e+00> : vector<8x256xf32>
    %234 = tpu.matmul %232, %1, %cst_62 {dimension_numbers = #tpu.dot_dimension_numbers<[1], [0], [0], [1], [0, 0, 1, 1], [], []>} : vector<8x64xf32>, vector<64x256xf32>, vector<8x256xf32> -> vector<8x256xf32>
    %235 = arith.index_cast %c4_i32 : i32 to index
    %c0_63 = arith.constant 0 : index
    %c0_64 = arith.constant 0 : index
    %236 = vector.load %arg8[%235, %c0_63, %c0_64] : memref<8x8x256xf32, #tpu.memory_space<vmem>>, vector<1x8x256xf32>
    %237 = vector.shape_cast %236 : vector<1x8x256xf32> to vector<8x256xf32>
    %238 = vector.extract_strided_slice %237 {offsets = [0, 0], sizes = [8, 128], strides = [1, 1]} : vector<8x256xf32> to vector<8x128xf32>
    %239 = vector.extract_strided_slice %234 {offsets = [0, 0], sizes = [8, 128], strides = [1, 1]} : vector<8x256xf32> to vector<8x128xf32>
    %240 = arith.addf %238, %239 : vector<8x128xf32>
    %241 = arith.index_cast %233 : i32 to index
    %c0_65 = arith.constant 0 : index
    %c0_66 = arith.constant 0 : index
    %242 = vector.load %arg8[%241, %c0_65, %c0_66] : memref<8x8x256xf32, #tpu.memory_space<vmem>>, vector<1x8x256xf32>
    %243 = vector.shape_cast %242 : vector<1x8x256xf32> to vector<8x256xf32>
    %244 = vector.extract_strided_slice %243 {offsets = [0, 128], sizes = [8, 128], strides = [1, 1]} : vector<8x256xf32> to vector<8x128xf32>
    %245 = vector.extract_strided_slice %234 {offsets = [0, 128], sizes = [8, 128], strides = [1, 1]} : vector<8x256xf32> to vector<8x128xf32>
    %246 = arith.addf %244, %245 : vector<8x128xf32>
    %247 = vector.extract_strided_slice %240 {offsets = [0, 0], sizes = [8, 96], strides = [1, 1]} : vector<8x128xf32> to vector<8x96xf32>
    %248 = arith.negf %247 : vector<8x96xf32>
    %249 = math.exp %248 : vector<8x96xf32>
    %cst_67 = arith.constant 1.000000e+00 : f32
    %250 = vector.broadcast %cst_67 : f32 to vector<8x96xf32>
    %251 = arith.addf %250, %249 : vector<8x96xf32>
    %252 = arith.divf %250, %251 : vector<8x96xf32>
    %253 = vector.extract_strided_slice %252 {offsets = [0, 0], sizes = [8, 32], strides = [1, 1]} : vector<8x96xf32> to vector<8x32xf32>
    %254 = vector.extract_strided_slice %252 {offsets = [0, 32], sizes = [8, 32], strides = [1, 1]} : vector<8x96xf32> to vector<8x32xf32>
    %255 = vector.extract_strided_slice %252 {offsets = [0, 64], sizes = [8, 32], strides = [1, 1]} : vector<8x96xf32> to vector<8x32xf32>
    %256 = vector.extract_strided_slice %240 {offsets = [0, 96], sizes = [8, 32], strides = [1, 1]} : vector<8x128xf32> to vector<8x32xf32>
    %257 = math.tanh %256 : vector<8x32xf32>
    %258 = arith.mulf %254, %205 : vector<8x32xf32>
    %259 = arith.mulf %253, %257 : vector<8x32xf32>
    %260 = arith.addf %258, %259 : vector<8x32xf32>
    %261 = math.tanh %260 : vector<8x32xf32>
    %262 = arith.mulf %255, %261 : vector<8x32xf32>
    %263 = vector.extract_strided_slice %246 {offsets = [0, 0], sizes = [8, 96], strides = [1, 1]} : vector<8x128xf32> to vector<8x96xf32>
    %264 = arith.negf %263 : vector<8x96xf32>
    %265 = math.exp %264 : vector<8x96xf32>
    %cst_68 = arith.constant 1.000000e+00 : f32
    %266 = vector.broadcast %cst_68 : f32 to vector<8x96xf32>
    %267 = arith.addf %266, %265 : vector<8x96xf32>
    %268 = arith.divf %266, %267 : vector<8x96xf32>
    %269 = vector.extract_strided_slice %268 {offsets = [0, 0], sizes = [8, 32], strides = [1, 1]} : vector<8x96xf32> to vector<8x32xf32>
    %270 = vector.extract_strided_slice %268 {offsets = [0, 32], sizes = [8, 32], strides = [1, 1]} : vector<8x96xf32> to vector<8x32xf32>
    %271 = vector.extract_strided_slice %268 {offsets = [0, 64], sizes = [8, 32], strides = [1, 1]} : vector<8x96xf32> to vector<8x32xf32>
    %272 = vector.extract_strided_slice %246 {offsets = [0, 96], sizes = [8, 32], strides = [1, 1]} : vector<8x128xf32> to vector<8x32xf32>
    %273 = math.tanh %272 : vector<8x32xf32>
    %274 = arith.mulf %270, %221 : vector<8x32xf32>
    %275 = arith.mulf %269, %273 : vector<8x32xf32>
    %276 = arith.addf %274, %275 : vector<8x32xf32>
    %277 = math.tanh %276 : vector<8x32xf32>
    %278 = arith.mulf %271, %277 : vector<8x32xf32>
    %279 = arith.index_cast %c4_i32 : i32 to index
    %c0_69 = arith.constant 0 : index
    %c0_70 = arith.constant 0 : index
    %280 = vector.load %arg9[%279, %c0_69, %c0_70] : memref<8x8x64xf32, #tpu.memory_space<vmem>>, vector<1x8x32xf32>
    %281 = vector.shape_cast %280 : vector<1x8x32xf32> to vector<8x32xf32>
    %282 = vector.shape_cast %262 : vector<8x32xf32> to vector<1x8x32xf32>
    tpu.vector_store %arg9[%279, %c0_69, %c0_70], %282 {strides = array<i32>} : memref<8x8x64xf32, #tpu.memory_space<vmem>>, vector<1x8x32xf32>,
    %283 = arith.index_cast %233 : i32 to index
    %c0_71 = arith.constant 0 : index
    %c32_72 = arith.constant 32 : index
    %284 = vector.load %arg9[%283, %c0_71, %c32_72] : memref<8x8x64xf32, #tpu.memory_space<vmem>>, vector<1x8x32xf32>
    %285 = vector.shape_cast %284 : vector<1x8x32xf32> to vector<8x32xf32>
    %286 = vector.shape_cast %278 : vector<8x32xf32> to vector<1x8x32xf32>
    tpu.vector_store %arg9[%283, %c0_71, %c32_72], %286 {strides = array<i32>} : memref<8x8x64xf32, #tpu.memory_space<vmem>>, vector<1x8x32xf32>,
    %287 = tpu.concatenate %262, %278 in 1 : vector<8x32xf32>, vector<8x32xf32> -> vector<8x64xf32>
    %c5_i32 = arith.constant 5 : i32
    %c7_i32_73 = arith.constant 7 : i32
    %288 = arith.subi %c7_i32_73, %c5_i32 : i32
    %cst_74 = arith.constant dense<0.000000e+00> : vector<8x256xf32>
    %289 = tpu.matmul %287, %1, %cst_74 {dimension_numbers = #tpu.dot_dimension_numbers<[1], [0], [0], [1], [0, 0, 1, 1], [], []>} : vector<8x64xf32>, vector<64x256xf32>, vector<8x256xf32> -> vector<8x256xf32>
    %290 = arith.index_cast %c5_i32 : i32 to index
    %c0_75 = arith.constant 0 : index
    %c0_76 = arith.constant 0 : index
    %291 = vector.load %arg8[%290, %c0_75, %c0_76] : memref<8x8x256xf32, #tpu.memory_space<vmem>>, vector<1x8x256xf32>
    %292 = vector.shape_cast %291 : vector<1x8x256xf32> to vector<8x256xf32>
    %293 = vector.extract_strided_slice %292 {offsets = [0, 0], sizes = [8, 128], strides = [1, 1]} : vector<8x256xf32> to vector<8x128xf32>
    %294 = vector.extract_strided_slice %289 {offsets = [0, 0], sizes = [8, 128], strides = [1, 1]} : vector<8x256xf32> to vector<8x128xf32>
    %295 = arith.addf %293, %294 : vector<8x128xf32>
    %296 = arith.index_cast %288 : i32 to index
    %c0_77 = arith.constant 0 : index
    %c0_78 = arith.constant 0 : index
    %297 = vector.load %arg8[%296, %c0_77, %c0_78] : memref<8x8x256xf32, #tpu.memory_space<vmem>>, vector<1x8x256xf32>
    %298 = vector.shape_cast %297 : vector<1x8x256xf32> to vector<8x256xf32>
    %299 = vector.extract_strided_slice %298 {offsets = [0, 128], sizes = [8, 128], strides = [1, 1]} : vector<8x256xf32> to vector<8x128xf32>
    %300 = vector.extract_strided_slice %289 {offsets = [0, 128], sizes = [8, 128], strides = [1, 1]} : vector<8x256xf32> to vector<8x128xf32>
    %301 = arith.addf %299, %300 : vector<8x128xf32>
    %302 = vector.extract_strided_slice %295 {offsets = [0, 0], sizes = [8, 96], strides = [1, 1]} : vector<8x128xf32> to vector<8x96xf32>
    %303 = arith.negf %302 : vector<8x96xf32>
    %304 = math.exp %303 : vector<8x96xf32>
    %cst_79 = arith.constant 1.000000e+00 : f32
    %305 = vector.broadcast %cst_79 : f32 to vector<8x96xf32>
    %306 = arith.addf %305, %304 : vector<8x96xf32>
    %307 = arith.divf %305, %306 : vector<8x96xf32>
    %308 = vector.extract_strided_slice %307 {offsets = [0, 0], sizes = [8, 32], strides = [1, 1]} : vector<8x96xf32> to vector<8x32xf32>
    %309 = vector.extract_strided_slice %307 {offsets = [0, 32], sizes = [8, 32], strides = [1, 1]} : vector<8x96xf32> to vector<8x32xf32>
    %310 = vector.extract_strided_slice %307 {offsets = [0, 64], sizes = [8, 32], strides = [1, 1]} : vector<8x96xf32> to vector<8x32xf32>
    %311 = vector.extract_strided_slice %295 {offsets = [0, 96], sizes = [8, 32], strides = [1, 1]} : vector<8x128xf32> to vector<8x32xf32>
    %312 = math.tanh %311 : vector<8x32xf32>
    %313 = arith.mulf %309, %260 : vector<8x32xf32>
    %314 = arith.mulf %308, %312 : vector<8x32xf32>
    %315 = arith.addf %313, %314 : vector<8x32xf32>
    %316 = math.tanh %315 : vector<8x32xf32>
    %317 = arith.mulf %310, %316 : vector<8x32xf32>
    %318 = vector.extract_strided_slice %301 {offsets = [0, 0], sizes = [8, 96], strides = [1, 1]} : vector<8x128xf32> to vector<8x96xf32>
    %319 = arith.negf %318 : vector<8x96xf32>
    %320 = math.exp %319 : vector<8x96xf32>
    %cst_80 = arith.constant 1.000000e+00 : f32
    %321 = vector.broadcast %cst_80 : f32 to vector<8x96xf32>
    %322 = arith.addf %321, %320 : vector<8x96xf32>
    %323 = arith.divf %321, %322 : vector<8x96xf32>
    %324 = vector.extract_strided_slice %323 {offsets = [0, 0], sizes = [8, 32], strides = [1, 1]} : vector<8x96xf32> to vector<8x32xf32>
    %325 = vector.extract_strided_slice %323 {offsets = [0, 32], sizes = [8, 32], strides = [1, 1]} : vector<8x96xf32> to vector<8x32xf32>
    %326 = vector.extract_strided_slice %323 {offsets = [0, 64], sizes = [8, 32], strides = [1, 1]} : vector<8x96xf32> to vector<8x32xf32>
    %327 = vector.extract_strided_slice %301 {offsets = [0, 96], sizes = [8, 32], strides = [1, 1]} : vector<8x128xf32> to vector<8x32xf32>
    %328 = math.tanh %327 : vector<8x32xf32>
    %329 = arith.mulf %325, %276 : vector<8x32xf32>
    %330 = arith.mulf %324, %328 : vector<8x32xf32>
    %331 = arith.addf %329, %330 : vector<8x32xf32>
    %332 = math.tanh %331 : vector<8x32xf32>
    %333 = arith.mulf %326, %332 : vector<8x32xf32>
    %334 = arith.index_cast %c5_i32 : i32 to index
    %c0_81 = arith.constant 0 : index
    %c0_82 = arith.constant 0 : index
    %335 = vector.load %arg9[%334, %c0_81, %c0_82] : memref<8x8x64xf32, #tpu.memory_space<vmem>>, vector<1x8x32xf32>
    %336 = vector.shape_cast %335 : vector<1x8x32xf32> to vector<8x32xf32>
    %337 = vector.shape_cast %317 : vector<8x32xf32> to vector<1x8x32xf32>
    tpu.vector_store %arg9[%334, %c0_81, %c0_82], %337 {strides = array<i32>} : memref<8x8x64xf32, #tpu.memory_space<vmem>>, vector<1x8x32xf32>,
    %338 = arith.index_cast %288 : i32 to index
    %c0_83 = arith.constant 0 : index
    %c32_84 = arith.constant 32 : index
    %339 = vector.load %arg9[%338, %c0_83, %c32_84] : memref<8x8x64xf32, #tpu.memory_space<vmem>>, vector<1x8x32xf32>
    %340 = vector.shape_cast %339 : vector<1x8x32xf32> to vector<8x32xf32>
    %341 = vector.shape_cast %333 : vector<8x32xf32> to vector<1x8x32xf32>
    tpu.vector_store %arg9[%338, %c0_83, %c32_84], %341 {strides = array<i32>} : memref<8x8x64xf32, #tpu.memory_space<vmem>>, vector<1x8x32xf32>,
    %342 = tpu.concatenate %317, %333 in 1 : vector<8x32xf32>, vector<8x32xf32> -> vector<8x64xf32>
    %c6_i32 = arith.constant 6 : i32
    %c7_i32_85 = arith.constant 7 : i32
    %343 = arith.subi %c7_i32_85, %c6_i32 : i32
    %cst_86 = arith.constant dense<0.000000e+00> : vector<8x256xf32>
    %344 = tpu.matmul %342, %1, %cst_86 {dimension_numbers = #tpu.dot_dimension_numbers<[1], [0], [0], [1], [0, 0, 1, 1], [], []>} : vector<8x64xf32>, vector<64x256xf32>, vector<8x256xf32> -> vector<8x256xf32>
    %345 = arith.index_cast %c6_i32 : i32 to index
    %c0_87 = arith.constant 0 : index
    %c0_88 = arith.constant 0 : index
    %346 = vector.load %arg8[%345, %c0_87, %c0_88] : memref<8x8x256xf32, #tpu.memory_space<vmem>>, vector<1x8x256xf32>
    %347 = vector.shape_cast %346 : vector<1x8x256xf32> to vector<8x256xf32>
    %348 = vector.extract_strided_slice %347 {offsets = [0, 0], sizes = [8, 128], strides = [1, 1]} : vector<8x256xf32> to vector<8x128xf32>
    %349 = vector.extract_strided_slice %344 {offsets = [0, 0], sizes = [8, 128], strides = [1, 1]} : vector<8x256xf32> to vector<8x128xf32>
    %350 = arith.addf %348, %349 : vector<8x128xf32>
    %351 = arith.index_cast %343 : i32 to index
    %c0_89 = arith.constant 0 : index
    %c0_90 = arith.constant 0 : index
    %352 = vector.load %arg8[%351, %c0_89, %c0_90] : memref<8x8x256xf32, #tpu.memory_space<vmem>>, vector<1x8x256xf32>
    %353 = vector.shape_cast %352 : vector<1x8x256xf32> to vector<8x256xf32>
    %354 = vector.extract_strided_slice %353 {offsets = [0, 128], sizes = [8, 128], strides = [1, 1]} : vector<8x256xf32> to vector<8x128xf32>
    %355 = vector.extract_strided_slice %344 {offsets = [0, 128], sizes = [8, 128], strides = [1, 1]} : vector<8x256xf32> to vector<8x128xf32>
    %356 = arith.addf %354, %355 : vector<8x128xf32>
    %357 = vector.extract_strided_slice %350 {offsets = [0, 0], sizes = [8, 96], strides = [1, 1]} : vector<8x128xf32> to vector<8x96xf32>
    %358 = arith.negf %357 : vector<8x96xf32>
    %359 = math.exp %358 : vector<8x96xf32>
    %cst_91 = arith.constant 1.000000e+00 : f32
    %360 = vector.broadcast %cst_91 : f32 to vector<8x96xf32>
    %361 = arith.addf %360, %359 : vector<8x96xf32>
    %362 = arith.divf %360, %361 : vector<8x96xf32>
    %363 = vector.extract_strided_slice %362 {offsets = [0, 0], sizes = [8, 32], strides = [1, 1]} : vector<8x96xf32> to vector<8x32xf32>
    %364 = vector.extract_strided_slice %362 {offsets = [0, 32], sizes = [8, 32], strides = [1, 1]} : vector<8x96xf32> to vector<8x32xf32>
    %365 = vector.extract_strided_slice %362 {offsets = [0, 64], sizes = [8, 32], strides = [1, 1]} : vector<8x96xf32> to vector<8x32xf32>
    %366 = vector.extract_strided_slice %350 {offsets = [0, 96], sizes = [8, 32], strides = [1, 1]} : vector<8x128xf32> to vector<8x32xf32>
    %367 = math.tanh %366 : vector<8x32xf32>
    %368 = arith.mulf %364, %315 : vector<8x32xf32>
    %369 = arith.mulf %363, %367 : vector<8x32xf32>
    %370 = arith.addf %368, %369 : vector<8x32xf32>
    %371 = math.tanh %370 : vector<8x32xf32>
    %372 = arith.mulf %365, %371 : vector<8x32xf32>
    %373 = vector.extract_strided_slice %356 {offsets = [0, 0], sizes = [8, 96], strides = [1, 1]} : vector<8x128xf32> to vector<8x96xf32>
    %374 = arith.negf %373 : vector<8x96xf32>
    %375 = math.exp %374 : vector<8x96xf32>
    %cst_92 = arith.constant 1.000000e+00 : f32
    %376 = vector.broadcast %cst_92 : f32 to vector<8x96xf32>
    %377 = arith.addf %376, %375 : vector<8x96xf32>
    %378 = arith.divf %376, %377 : vector<8x96xf32>
    %379 = vector.extract_strided_slice %378 {offsets = [0, 0], sizes = [8, 32], strides = [1, 1]} : vector<8x96xf32> to vector<8x32xf32>
    %380 = vector.extract_strided_slice %378 {offsets = [0, 32], sizes = [8, 32], strides = [1, 1]} : vector<8x96xf32> to vector<8x32xf32>
    %381 = vector.extract_strided_slice %378 {offsets = [0, 64], sizes = [8, 32], strides = [1, 1]} : vector<8x96xf32> to vector<8x32xf32>
    %382 = vector.extract_strided_slice %356 {offsets = [0, 96], sizes = [8, 32], strides = [1, 1]} : vector<8x128xf32> to vector<8x32xf32>
    %383 = math.tanh %382 : vector<8x32xf32>
    %384 = arith.mulf %380, %331 : vector<8x32xf32>
    %385 = arith.mulf %379, %383 : vector<8x32xf32>
    %386 = arith.addf %384, %385 : vector<8x32xf32>
    %387 = math.tanh %386 : vector<8x32xf32>
    %388 = arith.mulf %381, %387 : vector<8x32xf32>
    %389 = arith.index_cast %c6_i32 : i32 to index
    %c0_93 = arith.constant 0 : index
    %c0_94 = arith.constant 0 : index
    %390 = vector.load %arg9[%389, %c0_93, %c0_94] : memref<8x8x64xf32, #tpu.memory_space<vmem>>, vector<1x8x32xf32>
    %391 = vector.shape_cast %390 : vector<1x8x32xf32> to vector<8x32xf32>
    %392 = vector.shape_cast %372 : vector<8x32xf32> to vector<1x8x32xf32>
    tpu.vector_store %arg9[%389, %c0_93, %c0_94], %392 {strides = array<i32>} : memref<8x8x64xf32, #tpu.memory_space<vmem>>, vector<1x8x32xf32>,
    %393 = arith.index_cast %343 : i32 to index
    %c0_95 = arith.constant 0 : index
    %c32_96 = arith.constant 32 : index
    %394 = vector.load %arg9[%393, %c0_95, %c32_96] : memref<8x8x64xf32, #tpu.memory_space<vmem>>, vector<1x8x32xf32>
    %395 = vector.shape_cast %394 : vector<1x8x32xf32> to vector<8x32xf32>
    %396 = vector.shape_cast %388 : vector<8x32xf32> to vector<1x8x32xf32>
    tpu.vector_store %arg9[%393, %c0_95, %c32_96], %396 {strides = array<i32>} : memref<8x8x64xf32, #tpu.memory_space<vmem>>, vector<1x8x32xf32>,
    %397 = tpu.concatenate %372, %388 in 1 : vector<8x32xf32>, vector<8x32xf32> -> vector<8x64xf32>
    %c7_i32_97 = arith.constant 7 : i32
    %c7_i32_98 = arith.constant 7 : i32
    %398 = arith.subi %c7_i32_98, %c7_i32_97 : i32
    %cst_99 = arith.constant dense<0.000000e+00> : vector<8x256xf32>
    %399 = tpu.matmul %397, %1, %cst_99 {dimension_numbers = #tpu.dot_dimension_numbers<[1], [0], [0], [1], [0, 0, 1, 1], [], []>} : vector<8x64xf32>, vector<64x256xf32>, vector<8x256xf32> -> vector<8x256xf32>
    %400 = arith.index_cast %c7_i32_97 : i32 to index
    %c0_100 = arith.constant 0 : index
    %c0_101 = arith.constant 0 : index
    %401 = vector.load %arg8[%400, %c0_100, %c0_101] : memref<8x8x256xf32, #tpu.memory_space<vmem>>, vector<1x8x256xf32>
    %402 = vector.shape_cast %401 : vector<1x8x256xf32> to vector<8x256xf32>
    %403 = vector.extract_strided_slice %402 {offsets = [0, 0], sizes = [8, 128], strides = [1, 1]} : vector<8x256xf32> to vector<8x128xf32>
    %404 = vector.extract_strided_slice %399 {offsets = [0, 0], sizes = [8, 128], strides = [1, 1]} : vector<8x256xf32> to vector<8x128xf32>
    %405 = arith.addf %403, %404 : vector<8x128xf32>
    %406 = arith.index_cast %398 : i32 to index
    %c0_102 = arith.constant 0 : index
    %c0_103 = arith.constant 0 : index
    %407 = vector.load %arg8[%406, %c0_102, %c0_103] : memref<8x8x256xf32, #tpu.memory_space<vmem>>, vector<1x8x256xf32>
    %408 = vector.shape_cast %407 : vector<1x8x256xf32> to vector<8x256xf32>
    %409 = vector.extract_strided_slice %408 {offsets = [0, 128], sizes = [8, 128], strides = [1, 1]} : vector<8x256xf32> to vector<8x128xf32>
    %410 = vector.extract_strided_slice %399 {offsets = [0, 128], sizes = [8, 128], strides = [1, 1]} : vector<8x256xf32> to vector<8x128xf32>
    %411 = arith.addf %409, %410 : vector<8x128xf32>
    %412 = vector.extract_strided_slice %405 {offsets = [0, 0], sizes = [8, 96], strides = [1, 1]} : vector<8x128xf32> to vector<8x96xf32>
    %413 = arith.negf %412 : vector<8x96xf32>
    %414 = math.exp %413 : vector<8x96xf32>
    %cst_104 = arith.constant 1.000000e+00 : f32
    %415 = vector.broadcast %cst_104 : f32 to vector<8x96xf32>
    %416 = arith.addf %415, %414 : vector<8x96xf32>
    %417 = arith.divf %415, %416 : vector<8x96xf32>
    %418 = vector.extract_strided_slice %417 {offsets = [0, 0], sizes = [8, 32], strides = [1, 1]} : vector<8x96xf32> to vector<8x32xf32>
    %419 = vector.extract_strided_slice %417 {offsets = [0, 32], sizes = [8, 32], strides = [1, 1]} : vector<8x96xf32> to vector<8x32xf32>
    %420 = vector.extract_strided_slice %417 {offsets = [0, 64], sizes = [8, 32], strides = [1, 1]} : vector<8x96xf32> to vector<8x32xf32>
    %421 = vector.extract_strided_slice %405 {offsets = [0, 96], sizes = [8, 32], strides = [1, 1]} : vector<8x128xf32> to vector<8x32xf32>
    %422 = math.tanh %421 : vector<8x32xf32>
    %423 = arith.mulf %419, %370 : vector<8x32xf32>
    %424 = arith.mulf %418, %422 : vector<8x32xf32>
    %425 = arith.addf %423, %424 : vector<8x32xf32>
    %426 = math.tanh %425 : vector<8x32xf32>
    %427 = arith.mulf %420, %426 : vector<8x32xf32>
    %428 = vector.extract_strided_slice %411 {offsets = [0, 0], sizes = [8, 96], strides = [1, 1]} : vector<8x128xf32> to vector<8x96xf32>
    %429 = arith.negf %428 : vector<8x96xf32>
    %430 = math.exp %429 : vector<8x96xf32>
    %cst_105 = arith.constant 1.000000e+00 : f32
    %431 = vector.broadcast %cst_105 : f32 to vector<8x96xf32>
    %432 = arith.addf %431, %430 : vector<8x96xf32>
    %433 = arith.divf %431, %432 : vector<8x96xf32>
    %434 = vector.extract_strided_slice %433 {offsets = [0, 0], sizes = [8, 32], strides = [1, 1]} : vector<8x96xf32> to vector<8x32xf32>
    %435 = vector.extract_strided_slice %433 {offsets = [0, 32], sizes = [8, 32], strides = [1, 1]} : vector<8x96xf32> to vector<8x32xf32>
    %436 = vector.extract_strided_slice %433 {offsets = [0, 64], sizes = [8, 32], strides = [1, 1]} : vector<8x96xf32> to vector<8x32xf32>
    %437 = vector.extract_strided_slice %411 {offsets = [0, 96], sizes = [8, 32], strides = [1, 1]} : vector<8x128xf32> to vector<8x32xf32>
    %438 = math.tanh %437 : vector<8x32xf32>
    %439 = arith.mulf %435, %386 : vector<8x32xf32>
    %440 = arith.mulf %434, %438 : vector<8x32xf32>
    %441 = arith.addf %439, %440 : vector<8x32xf32>
    %442 = math.tanh %441 : vector<8x32xf32>
    %443 = arith.mulf %436, %442 : vector<8x32xf32>
    %444 = arith.index_cast %c7_i32_97 : i32 to index
    %c0_106 = arith.constant 0 : index
    %c0_107 = arith.constant 0 : index
    %445 = vector.load %arg9[%444, %c0_106, %c0_107] : memref<8x8x64xf32, #tpu.memory_space<vmem>>, vector<1x8x32xf32>
    %446 = vector.shape_cast %445 : vector<1x8x32xf32> to vector<8x32xf32>
    %447 = vector.shape_cast %427 : vector<8x32xf32> to vector<1x8x32xf32>
    tpu.vector_store %arg9[%444, %c0_106, %c0_107], %447 {strides = array<i32>} : memref<8x8x64xf32, #tpu.memory_space<vmem>>, vector<1x8x32xf32>,
    %448 = arith.index_cast %398 : i32 to index
    %c0_108 = arith.constant 0 : index
    %c32_109 = arith.constant 32 : index
    %449 = vector.load %arg9[%448, %c0_108, %c32_109] : memref<8x8x64xf32, #tpu.memory_space<vmem>>, vector<1x8x32xf32>
    %450 = vector.shape_cast %449 : vector<1x8x32xf32> to vector<8x32xf32>
    %451 = vector.shape_cast %443 : vector<8x32xf32> to vector<1x8x32xf32>
    tpu.vector_store %arg9[%448, %c0_108, %c32_109], %451 {strides = array<i32>} : memref<8x8x64xf32, #tpu.memory_space<vmem>>, vector<1x8x32xf32>,
    %452 = tpu.concatenate %427, %443 in 1 : vector<8x32xf32>, vector<8x32xf32> -> vector<8x64xf32>
    %c8_i32 = arith.constant 8 : i32
    %c0_110 = arith.constant 0 : index
    %c0_111 = arith.constant 0 : index
    %c0_112 = arith.constant 0 : index
    %453 = vector.load %arg9[%c0_110, %c0_111, %c0_112] : memref<8x8x64xf32, #tpu.memory_space<vmem>>, vector<8x8x64xf32>
    %454 = vector.shape_cast %453 : vector<8x8x64xf32> to vector<64x64xf32>
    %cst_113 = arith.constant dense<0.000000e+00> : vector<64x8xf32>
    %455 = tpu.matmul %454, %2, %cst_113 {dimension_numbers = #tpu.dot_dimension_numbers<[1], [0], [0], [1], [0, 0, 1, 1], [], []>} : vector<64x64xf32>, vector<64x8xf32>, vector<64x8xf32> -> vector<64x8xf32>
    %c0_114 = arith.constant 0 : index
    %c0_115 = arith.constant 0 : index
    %456 = vector.load %arg6[%c0_114, %c0_115] : memref<1x8xf32, #tpu.memory_space<vmem>>, vector<1x8xf32>
    %457 = vector.broadcast %456 : vector<1x8xf32> to vector<64x8xf32>
    %458 = arith.addf %455, %457 : vector<64x8xf32>
    %459 = vector.shape_cast %458 : vector<64x8xf32> to vector<8x8x8xf32>
    %c0_116 = arith.constant 0 : index
    %c0_117 = arith.constant 0 : index
    %c0_118 = arith.constant 0 : index
    %460 = vector.load %arg7[%c0_116, %c0_117, %c0_118] : memref<8x8x8xf32, #tpu.memory_space<vmem>>, vector<8x8x8xf32>
    tpu.vector_store %arg7[%c0_116, %c0_117, %c0_118], %459 {strides = array<i32>} : memref<8x8x8xf32, #tpu.memory_space<vmem>>, vector<8x8x8xf32>,
    return
  }
  func.func @transform_0(%arg0: i32) -> (i32, i32, i32) {
    %c0_i32 = arith.constant 0 : i32
    %c0_i32_0 = arith.constant 0 : i32
    %c0_i32_1 = arith.constant 0 : i32
    return %c0_i32, %arg0, %c0_i32_0 : i32, i32, i32
  }
  func.func @transform_1(%arg0: i32) -> (i32, i32) {
    %c0_i32 = arith.constant 0 : i32
    %c0_i32_0 = arith.constant 0 : i32
    %c0_i32_1 = arith.constant 0 : i32
    return %c0_i32, %c0_i32_0 : i32, i32
  }
  func.func @transform_2(%arg0: i32) -> (i32, i32) {
    %c0_i32 = arith.constant 0 : i32
    %c0_i32_0 = arith.constant 0 : i32
    %c0_i32_1 = arith.constant 0 : i32
    return %c0_i32, %c0_i32_0 : i32, i32
  }
  func.func @transform_3(%arg0: i32) -> (i32, i32) {
    %c0_i32 = arith.constant 0 : i32
    %c0_i32_0 = arith.constant 0 : i32
    %c0_i32_1 = arith.constant 0 : i32
    return %c0_i32, %c0_i32_0 : i32, i32
  }
  func.func @transform_4(%arg0: i32) -> (i32, i32) {
    %c0_i32 = arith.constant 0 : i32
    %c0_i32_0 = arith.constant 0 : i32
    %c0_i32_1 = arith.constant 0 : i32
    return %c0_i32, %c0_i32_0 : i32, i32
  }
  func.func @transform_5(%arg0: i32) -> (i32, i32) {
    %c0_i32 = arith.constant 0 : i32
    %c0_i32_0 = arith.constant 0 : i32
    %c0_i32_1 = arith.constant 0 : i32
    return %c0_i32, %c0_i32_0 : i32, i32
  }
  func.func @transform_6(%arg0: i32) -> (i32, i32, i32) {
    %c0_i32 = arith.constant 0 : i32
    %c0_i32_0 = arith.constant 0 : i32
    %c0_i32_1 = arith.constant 0 : i32
    return %c0_i32, %arg0, %c0_i32_0 : i32, i32, i32
  }
}

</mosaic_0001>

<llo_original>
// kernel: tpu_custom_call.1
$region0: #{tpu_custom_call.1}
  #allocation0 [shape = 'u32[]', space=smem, size = 0x4, offset = 0x4, fixed_abs, tag = 'smem constant byte address 0x4 - core index']
  #allocation1 [shape = 'u32[144,128]{1,0:T(1,128)}', space=vmem, size = 0x12000, scoped, tag = 'internal scratch']
  #allocation2 [shape = 'f32[8,8,256]{2,1,0:T(8,128)}', space=vmem, size = 0x10000, scoped, tag = 'scratch operand']
  #allocation3 [shape = 'f32[8,8,64]{2,1,0:T(8,128)}', space=vmem, size = 0x8000, scoped, tag = 'scratch operand']
  %s0 = inlined_call_operand.vmem [shape: f32[8,8,16], index: 0, kind: input, shape index: {}]
  %s1 = inlined_call_operand.hbm [shape: f32[16,256], index: 1, kind: input, shape index: {}]
  %s2 = inlined_call_operand.hbm [shape: f32[64,256], index: 2, kind: input, shape index: {}]
  %s3 = inlined_call_operand.vmem [shape: f32[1,256], index: 3, kind: input, shape index: {}]
  %s4 = inlined_call_operand.vmem [shape: f32[64,8], index: 4, kind: input, shape index: {}]
  %s5 = inlined_call_operand.vmem [shape: f32[1,8], index: 5, kind: input, shape index: {}]
  %s6 = inlined_call_operand.hbm [shape: f32[8,8,8], index: 6, kind: output, shape index: {}]
  %s7 = sld [smem:[#allocation0]]
  $region42: #{tpu_custom_call.1} parent=0
    _
  %s9 = ssub.s32 1, %s7
  %s10 = scalar_select 0, %s9, %s7
  $region1: #{tpu_custom_call.1} parent=0
    #allocation4 [shape = 'u8[16384]{0}', space=vmem, size = 0x4000, scoped, tag = 'input window, operand 1, single buffered']
    #allocation5 [shape = 's32[1]{0}', space=sflag, size = 0x4, scoped, tag = 'scoped memory for tpu_custom_call.1']
    #allocation6 [shape = 's32[1]{0}', space=sflag, size = 0x4, scoped, tag = 'scoped memory for tpu_custom_call.1']
    #allocation7 [shape = 'u8[65536]{0}', space=vmem, size = 0x10000, scoped, tag = 'input window, operand 2, single buffered']
    #allocation8 [shape = 's32[1]{0}', space=sflag, size = 0x4, scoped, tag = 'scoped memory for tpu_custom_call.1']
    #allocation9 [shape = 'u8[32768]{0}', space=vmem, size = 0x8000, scoped, tag = 'output window, operand 0, single buffered']
    %11 = vsyncpa [#allocation5], 0
    %12 = vsyncpa [#allocation8], 0
    %13 = vsyncpa [#allocation6], 0
    // Predicated region
    $region2: #{tpu_custom_call.1} parent=1 // pred_check
      _
    $region3: #{tpu_custom_call.1} parent=1 // pred_check_branch
      %15 = sbr.rel (0) target = $region5
    $region4: #{tpu_custom_call.1} parent=1 // pred_region
      _
    $region5: #{tpu_custom_call.1} parent=1 // pred_fallthru
      _
    // Predicated region
    $region6: #{tpu_custom_call.1} parent=1 // pred_check
      _
    $region7: #{tpu_custom_call.1} parent=1 // pred_check_branch
      %17 = sbr.rel (0) target = $region9
    $region8: #{tpu_custom_call.1} parent=1 // pred_region
      %s19 = ssub.s32 512, 512
      %20 = vsyncadd [#allocation5], %s19
      %s21 = sshll.u32 [#allocation4], 4
      %s22 = int_to_ptr.vmem [resolvable:$true] %s21
      %27 = dma.hbm_to_vmem [thread:$0]  %s1, 512, %s22, [#allocation5], 256, 256, 16
    $region9: #{tpu_custom_call.1} parent=1 // pred_fallthru
      _
    // Predicated region
    $region10: #{tpu_custom_call.1} parent=1 // pred_check
      _
    $region11: #{tpu_custom_call.1} parent=1 // pred_check_branch
      %29 = sbr.rel (0) target = $region13
    $region12: #{tpu_custom_call.1} parent=1 // pred_region
      %s31 = ssub.s32 2048, 2048
      %32 = vsyncadd [#allocation8], %s31
      %s33 = sshll.u32 [#allocation7], 4
      %s34 = int_to_ptr.vmem [resolvable:$true] %s33
      %39 = dma.hbm_to_vmem [thread:$0]  %s2, 2048, %s34, [#allocation8], 256, 256, 16
    $region13: #{tpu_custom_call.1} parent=1 // pred_fallthru
      _
    // Predicated region
    $region14: #{tpu_custom_call.1} parent=1 // pred_check
      _
    $region15: #{tpu_custom_call.1} parent=1 // pred_check_branch
      %41 = sbr.rel (0) target = $region17
    $region16: #{tpu_custom_call.1} parent=1 // pred_region
      _
    $region17: #{tpu_custom_call.1} parent=1 // pred_fallthru
      _
    // Predicated region
    $region18: #{tpu_custom_call.1} parent=1 // pred_check
      _
    $region19: #{tpu_custom_call.1} parent=1 // pred_check_branch
      %43 = sbr.rel (0) target = $region21
    $region20: #{tpu_custom_call.1} parent=1 // pred_region
      _
    $region21: #{tpu_custom_call.1} parent=1 // pred_fallthru
      _
    // Predicated region
    $region22: #{tpu_custom_call.1} parent=1 // pred_check
      _
    $region23: #{tpu_custom_call.1} parent=1 // pred_check_branch
      %45 = sbr.rel (0) target = $region25
    $region24: #{tpu_custom_call.1} parent=1 // pred_region
      _
    $region25: #{tpu_custom_call.1} parent=1 // pred_fallthru
      _
    // Predicated region
    $region26: #{tpu_custom_call.1} parent=1 // pred_check
      _
    $region27: #{tpu_custom_call.1} parent=1 // pred_check_branch
      %47 = sbr.rel (0) target = $region29
    $region28: #{tpu_custom_call.1} parent=1 // pred_region
      %48 = dma.done [#allocation5], 512
    $region29: #{tpu_custom_call.1} parent=1 // pred_fallthru
      _
    // Predicated region
    $region30: #{tpu_custom_call.1} parent=1 // pred_check
      _
    $region31: #{tpu_custom_call.1} parent=1 // pred_check_branch
      %50 = sbr.rel (0) target = $region33
    $region32: #{tpu_custom_call.1} parent=1 // pred_region
      %51 = dma.done [#allocation8], 2048
    $region33: #{tpu_custom_call.1} parent=1 // pred_fallthru
      _
    %v52 = vld [vmem:[#allocation4] sm:$0xff]
    %v53 = vld [vmem:[#allocation4 + $0x8] sm:$0xff]
    %v54 = vld [vmem:[#allocation4 + $0x10] sm:$0xff]
    %v55 = vld [vmem:[#allocation4 + $0x18] sm:$0xff]
    %v56 = vld [vmem:[#allocation7] sm:$0xff]
    %v57 = vld [vmem:[#allocation7 + $0x8] sm:$0xff]
    %v58 = vld [vmem:[#allocation7 + $0x10] sm:$0xff]
    %v59 = vld [vmem:[#allocation7 + $0x18] sm:$0xff]
    %v60 = vld [vmem:[#allocation7 + $0x20] sm:$0xff]
    %v61 = vld [vmem:[#allocation7 + $0x28] sm:$0xff]
    %v62 = vld [vmem:[#allocation7 + $0x30] sm:$0xff]
    %v63 = vld [vmem:[#allocation7 + $0x38] sm:$0xff]
    %v64 = vld [vmem:[#allocation7 + $0x40] sm:$0xff]
    %v65 = vld [vmem:[#allocation7 + $0x48] sm:$0xff]
    %v66 = vld [vmem:[#allocation7 + $0x50] sm:$0xff]
    %v67 = vld [vmem:[#allocation7 + $0x58] sm:$0xff]
    %v68 = vld [vmem:[#allocation7 + $0x60] sm:$0xff]
    %v69 = vld [vmem:[#allocation7 + $0x68] sm:$0xff]
    %v70 = vld [vmem:[#allocation7 + $0x70] sm:$0xff]
    %v71 = vld [vmem:[#allocation7 + $0x78] sm:$0xff]
    %v72 = vld [vmem:[%s4] sm:$0xff]
    %v73 = vld [vmem:[%s4 + $0x8] sm:$0xff]
    %v74 = vld [vmem:[%s4 + $0x10] sm:$0xff]
    %v75 = vld [vmem:[%s4 + $0x18] sm:$0xff]
    %v76 = vld [vmem:[%s4 + $0x20] sm:$0xff]
    %v77 = vld [vmem:[%s4 + $0x28] sm:$0xff]
    %v78 = vld [vmem:[%s4 + $0x30] sm:$0xff]
    %v79 = vld [vmem:[%s4 + $0x38] sm:$0xff]
    %v80 = vld [vmem:[%s0] sm:$0xff]
    %v81 = vld [vmem:[%s0 + $0x8] sm:$0xff]
    %v82 = vld [vmem:[%s0 + $0x10] sm:$0xff]
    %v83 = vld [vmem:[%s0 + $0x18] sm:$0xff]
    %v84 = vld [vmem:[%s0 + $0x20] sm:$0xff]
    %v85 = vld [vmem:[%s0 + $0x28] sm:$0xff]
    %v86 = vld [vmem:[%s0 + $0x30] sm:$0xff]
    %v87 = vld [vmem:[%s0 + $0x38] sm:$0xff]
    %v88 = vld [vmem:[%s3] sm:$0x3]
    %v90 = vlaneseq
    %v91 = vshrl.u32 %v90, 7
    %v92 = vsub.s32 0, %v91
    %v93 = vrot.slane %v88, %v92
    %v94 = vlaneseq
    %v95 = vshrl.u32 %v94, 7
    %v96 = vsub.s32 1, %v95
    %v97 = vrot.slane %v88, %v96
    %vm100 = vcmask 130048
    %v102 = vsel %vm100, %v80, 0
    %v105 = vsel %vm100, %v81, 0
    %v108 = vsel %vm100, %v82, 0
    %v111 = vsel %vm100, %v83, 0
    %v114 = vsel %vm100, %v84, 0
    %v117 = vsel %vm100, %v85, 0
    %v120 = vsel %vm100, %v86, 0
    %v123 = vsel %vm100, %v87, 0
    %125 = vmatprep.subr.mxu0 %v53
    %126 = vmatpush1.msra.mxu0 %v52
    %127 = vmatprep.subr.mxu0 %v55
    %128 = vmatpush1.msra.mxu0 %v54
    %129 = vmatprep.subr.mxu0 0.0
    %130 = vmatpush1.msra.mxu0 0.0
    %131 = vmatprep.subr.mxu0 0.0
    %132 = vmatpush1.msra.mxu0 0.0
    %133 = vmatprep.subr.mxu0 0.0
    %134 = vmatpush1.msra.mxu0 0.0
    %135 = vmatprep.subr.mxu0 0.0
    %136 = vmatpush1.msra.mxu0 0.0
    %137 = vmatprep.subr.mxu0 0.0
    %138 = vmatpush1.msra.mxu0 0.0
    %139 = vmatprep.subr.mxu0 0.0
    %140 = vmatpush1.msra.mxu0 0.0
    %141 = vmatprep.subr.mxu0 0.0
    %142 = vmatpush1.msra.mxu0 0.0
    %143 = vmatprep.subr.mxu0 0.0
    %144 = vmatpush1.msra.mxu0 0.0
    %145 = vmatprep.subr.mxu0 0.0
    %146 = vmatpush1.msra.mxu0 0.0
    %147 = vmatprep.subr.mxu0 0.0
    %148 = vmatpush1.msra.mxu0 0.0
    %149 = vmatprep.subr.mxu0 0.0
    %150 = vmatpush1.msra.mxu0 0.0
    %151 = vmatprep.subr.mxu0 0.0
    %152 = vmatpush1.msra.mxu0 0.0
    %153 = vmatprep.subr.mxu0 0.0
    %154 = vmatpush1.msra.mxu0 0.0
    %155 = vmatprep.subr.mxu0 0.0
    %156 = vmatpush1.msra.mxu0 0.0
    %157 = vmatprep.subr.mxu0 0.0
    %158 = vmatpush1.msra.mxu0 0.0
    %159 = vmatprep.subr.mxu0 0.0
    %160 = vmatpush1.msra.mxu0 0.0
    %161 = vmatprep.subr.mxu0 0.0
    %162 = vmatpush1.msra.mxu0 0.0
    %163 = vmatprep.subr.mxu0 0.0
    %164 = vmatpush1.msra.mxu0 0.0
    %165 = vmatprep.subr.mxu0 0.0
    %166 = vmatpush1.msra.mxu0 0.0
    %167 = vmatprep.subr.mxu0 0.0
    %168 = vmatpush1.msra.mxu0 0.0
    %169 = vmatprep.subr.mxu0 0.0
    %170 = vmatpush1.msra.mxu0 0.0
    %171 = vmatprep.subr.mxu0 0.0
    %172 = vmatpush1.msra.mxu0 0.0
    %173 = vmatprep.subr.mxu0 0.0
    %174 = vmatpush1.msra.mxu0 0.0
    %175 = vmatprep.subr.mxu0 0.0
    %176 = vmatpush1.msra.mxu0 0.0
    %177 = vmatprep.subr.mxu0 0.0
    %178 = vmatpush1.msra.mxu0 0.0
    %179 = vmatprep.subr.mxu0 0.0
    %180 = vmatpush1.msra.mxu0 0.0
    %181 = vmatprep.subr.mxu0 0.0
    %182 = vmatpush1.msra.mxu0 0.0
    %183 = vmatprep.subr.mxu0 0.0
    %184 = vmatpush1.msra.mxu0 0.0
    %185 = vmatprep.subr.mxu0 0.0
    %186 = vmatpush1.msra.mxu0 0.0
    %187 = vmatprep.subr.mxu0 0.0
    %188 = vmatpush1.msra.mxu0 0.0
    %189 = vmatprep.mubr.f32.mxu0 0.0
    %190 = vmatmul.mubr.f32.gmra.mrb[0].mxu0 %v102
    %v191 = vpop.f32.mrb[0].mxu0
    %v192 = vadd.f32 %v93, %v191
    %v193 = vpop.f32.mrb[0].mxu0
    %v194 = vadd.f32 %v97, %v193
    %195 = vmatprep.mubr.f32.mxu0 0.0
    %196 = vmatmul.mubr.f32.gmra.mrb[0].mxu0 %v105
    %v197 = vpop.f32.mrb[0].mxu0
    %v198 = vadd.f32 %v93, %v197
    %v199 = vpop.f32.mrb[0].mxu0
    %v200 = vadd.f32 %v97, %v199
    %201 = vmatprep.mubr.f32.mxu0 0.0
    %202 = vmatmul.mubr.f32.gmra.mrb[0].mxu0 %v108
    %v203 = vpop.f32.mrb[0].mxu0
    %v204 = vadd.f32 %v93, %v203
    %v205 = vpop.f32.mrb[0].mxu0
    %v206 = vadd.f32 %v97, %v205
    %207 = vmatprep.mubr.f32.mxu0 0.0
    %208 = vmatmul.mubr.f32.gmra.mrb[0].mxu0 %v111
    %v209 = vpop.f32.mrb[0].mxu0
    %v210 = vadd.f32 %v93, %v209
    %v211 = vpop.f32.mrb[0].mxu0
    %v212 = vadd.f32 %v97, %v211
    %213 = vmatprep.mubr.f32.mxu0 0.0
    %214 = vmatmul.mubr.f32.gmra.mrb[0].mxu0 %v114
    %v215 = vpop.f32.mrb[0].mxu0
    %v216 = vadd.f32 %v93, %v215
    %v217 = vpop.f32.mrb[0].mxu0
    %v218 = vadd.f32 %v97, %v217
    %219 = vmatprep.mubr.f32.mxu0 0.0
    %220 = vmatmul.mubr.f32.gmra.mrb[0].mxu0 %v117
    %v221 = vpop.f32.mrb[0].mxu0
    %v222 = vadd.f32 %v93, %v221
    %v223 = vpop.f32.mrb[0].mxu0
    %v224 = vadd.f32 %v97, %v223
    %225 = vmatprep.mubr.f32.mxu0 0.0
    %226 = vmatmul.mubr.f32.gmra.mrb[0].mxu0 %v120
    %v227 = vpop.f32.mrb[0].mxu0
    %v228 = vadd.f32 %v93, %v227
    %v229 = vpop.f32.mrb[0].mxu0
    %v230 = vadd.f32 %v97, %v229
    %231 = vmatprep.mubr.f32.mxu0 0.0
    %232 = vmatmul.mubr.f32.gmra.mrb[0].mxu0 %v123
    %v233 = vpop.f32.mrb[0].mxu0
    %v234 = vadd.f32 %v93, %v233
    %v235 = vpop.f32.mrb[0].mxu0
    %v236 = vadd.f32 %v97, %v235
    %237 = vdwg.mxu0
    %238 = vst [vmem:[#allocation2] sm:$0xff] %v192
    %239 = vst [vmem:[#allocation2 + $0x8] sm:$0xff] %v194
    %240 = vst [vmem:[#allocation2 + $0x10] sm:$0xff] %v198
    %241 = vst [vmem:[#allocation2 + $0x18] sm:$0xff] %v200
    %242 = vst [vmem:[#allocation2 + $0x20] sm:$0xff] %v204
    %243 = vst [vmem:[#allocation2 + $0x28] sm:$0xff] %v206
    %244 = vst [vmem:[#allocation2 + $0x30] sm:$0xff] %v210
    %245 = vst [vmem:[#allocation2 + $0x38] sm:$0xff] %v212
    %246 = vst [vmem:[#allocation2 + $0x40] sm:$0xff] %v216
    %247 = vst [vmem:[#allocation2 + $0x48] sm:$0xff] %v218
    %248 = vst [vmem:[#allocation2 + $0x50] sm:$0xff] %v222
    %249 = vst [vmem:[#allocation2 + $0x58] sm:$0xff] %v224
    %250 = vst [vmem:[#allocation2 + $0x60] sm:$0xff] %v228
    %251 = vst [vmem:[#allocation2 + $0x68] sm:$0xff] %v230
    %252 = vst [vmem:[#allocation2 + $0x70] sm:$0xff] %v234
    %253 = vst [vmem:[#allocation2 + $0x78] sm:$0xff] %v236
    %vm254 = vcmask 523264
    %v256 = vsel %vm254, 0.0, 0
    %258 = vmatprep.subr.mxu0 %v57
    %259 = vmatpush1.msra.mxu0 %v56
    %260 = vmatprep.subr.mxu0 %v59
    %261 = vmatpush1.msra.mxu0 %v58
    %262 = vmatprep.subr.mxu0 %v61
    %263 = vmatpush1.msra.mxu0 %v60
    %264 = vmatprep.subr.mxu0 %v63
    %265 = vmatpush1.msra.mxu0 %v62
    %266 = vmatprep.subr.mxu0 %v65
    %267 = vmatpush1.msra.mxu0 %v64
    %268 = vmatprep.subr.mxu0 %v67
    %269 = vmatpush1.msra.mxu0 %v66
    %270 = vmatprep.subr.mxu0 %v69
    %271 = vmatpush1.msra.mxu0 %v68
    %272 = vmatprep.subr.mxu0 %v71
    %273 = vmatpush1.msra.mxu0 %v70
    %274 = vmatprep.subr.mxu0 0.0
    %275 = vmatpush1.msra.mxu0 0.0
    %276 = vmatprep.subr.mxu0 0.0
    %277 = vmatpush1.msra.mxu0 0.0
    %278 = vmatprep.subr.mxu0 0.0
    %279 = vmatpush1.msra.mxu0 0.0
    %280 = vmatprep.subr.mxu0 0.0
    %281 = vmatpush1.msra.mxu0 0.0
    %282 = vmatprep.subr.mxu0 0.0
    %283 = vmatpush1.msra.mxu0 0.0
    %284 = vmatprep.subr.mxu0 0.0
    %285 = vmatpush1.msra.mxu0 0.0
    %286 = vmatprep.subr.mxu0 0.0
    %287 = vmatpush1.msra.mxu0 0.0
    %288 = vmatprep.subr.mxu0 0.0
    %289 = vmatpush1.msra.mxu0 0.0
    %290 = vmatprep.subr.mxu0 0.0
    %291 = vmatpush1.msra.mxu0 0.0
    %292 = vmatprep.subr.mxu0 0.0
    %293 = vmatpush1.msra.mxu0 0.0
    %294 = vmatprep.subr.mxu0 0.0
    %295 = vmatpush1.msra.mxu0 0.0
    %296 = vmatprep.subr.mxu0 0.0
    %297 = vmatpush1.msra.mxu0 0.0
    %298 = vmatprep.subr.mxu0 0.0
    %299 = vmatpush1.msra.mxu0 0.0
    %300 = vmatprep.subr.mxu0 0.0
    %301 = vmatpush1.msra.mxu0 0.0
    %302 = vmatprep.subr.mxu0 0.0
    %303 = vmatpush1.msra.mxu0 0.0
    %304 = vmatprep.subr.mxu0 0.0
    %305 = vmatpush1.msra.mxu0 0.0
    %306 = vmatprep.subr.mxu0 0.0
    %307 = vmatpush1.msra.mxu0 0.0
    %308 = vmatprep.subr.mxu0 0.0
    %309 = vmatpush1.msra.mxu0 0.0
    %310 = vmatprep.subr.mxu0 0.0
    %311 = vmatpush1.msra.mxu0 0.0
    %312 = vmatprep.subr.mxu0 0.0
    %313 = vmatpush1.msra.mxu0 0.0
    %314 = vmatprep.subr.mxu0 0.0
    %315 = vmatpush1.msra.mxu0 0.0
    %316 = vmatprep.subr.mxu0 0.0
    %317 = vmatpush1.msra.mxu0 0.0
    %318 = vmatprep.subr.mxu0 0.0
    %319 = vmatpush1.msra.mxu0 0.0
    %320 = vmatprep.subr.mxu0 0.0
    %321 = vmatpush1.msra.mxu0 0.0
    %322 = vmatprep.mubr.f32.mxu0 0.0
    %323 = vmatmul.mubr.f32.gmra.mrb[0].mxu0 %v256
    %v324 = vpop.f32.mrb[0].mxu0
    %v325 = vadd.f32 0.0, %v324
    %v326 = vpop.f32.mrb[0].mxu0
    %v327 = vadd.f32 0.0, %v326
    %328 = vdwg.mxu0
    %v329 = vld [vmem:[#allocation2] sm:$0xff]
    %v330 = vadd.f32 %v329, %v325
    %s331 = scalar_lea.vmem [#allocation2], 112
    %v332 = vld [vmem:[%s331 + $0x8] sm:$0xff]
    %v333 = vadd.f32 %v332, %v327
    %v334 = vxor.u32 %v330, 2147483648
    %v335 = vmul.f32 %v334, 1.442695
    %v336 = vpow.pop %v335
    %v337 = vadd.f32 %v336, 1.0
    %v338 = vrcp.pop %v337
    %v339 = vmul.f32 1.0, %v338
    %v340 = vtanh.pop %v330
    %v341 = vmul.f32 %v339, 0.0
    %343 = vrot.lane.b32.xlu0 %v340, 32
    %v344 = vpop.permute.xlu0 %343
    %v346 = vmul.f32 %v339, %v344
    %348 = vrot.lane.b32.xlu0 %v346, 32
    %v349 = vpop.permute.xlu0 %348
    %v351 = vadd.f32 %v341, %v349
    %v352 = vtanh.pop %v351
    %354 = vrot.lane.b32.xlu0 %v352, 32
    %v355 = vpop.permute.xlu0 %354
    %v357 = vmul.f32 %v339, %v355
    %v358 = vxor.u32 %v333, 2147483648
    %v359 = vmul.f32 %v358, 1.442695
    %v360 = vpow.pop %v359
    %v361 = vadd.f32 %v360, 1.0
    %v362 = vrcp.pop %v361
    %v363 = vmul.f32 1.0, %v362
    %v364 = vtanh.pop %v333
    %v365 = vmul.f32 %v363, 0.0
    %367 = vrot.lane.b32.xlu0 %v364, 32
    %v368 = vpop.permute.xlu0 %367
    %v370 = vmul.f32 %v363, %v368
    %372 = vrot.lane.b32.xlu0 %v370, 32
    %v373 = vpop.permute.xlu0 %372
    %v375 = vadd.f32 %v365, %v373
    %v376 = vtanh.pop %v375
    %378 = vrot.lane.b32.xlu0 %v376, 32
    %v379 = vpop.permute.xlu0 %378
    %v381 = vmul.f32 %v363, %v379
    %383 = vrot.lane.b32.xlu0 %v357, 64
    %v384 = vpop.permute.xlu0 %383
    %vm386 = vcmask 261120
    %387 = vst.msk [vmem:[#allocation3] sm:$0xff] %vm386, %v384
    %389 = vrot.lane.b32.xlu0 %v381, 96
    %v390 = vpop.permute.xlu0 %389
    %s392 = scalar_lea.vmem [#allocation3], 56
    %vm393 = vcmask 523520
    %394 = vst.msk [vmem:[%s392] sm:$0xff] %vm393, %v390
    %v395 = vsel %vm386, %v384, %v390
    %v397 = vsel %vm254, %v395, 0
    %399 = vmatprep.subr.mxu0 %v57
    %400 = vmatpush1.msra.mxu0 %v56
    %401 = vmatprep.subr.mxu0 %v59
    %402 = vmatpush1.msra.mxu0 %v58
    %403 = vmatprep.subr.mxu0 %v61
    %404 = vmatpush1.msra.mxu0 %v60
    %405 = vmatprep.subr.mxu0 %v63
    %406 = vmatpush1.msra.mxu0 %v62
    %407 = vmatprep.subr.mxu0 %v65
    %408 = vmatpush1.msra.mxu0 %v64
    %409 = vmatprep.subr.mxu0 %v67
    %410 = vmatpush1.msra.mxu0 %v66
    %411 = vmatprep.subr.mxu0 %v69
    %412 = vmatpush1.msra.mxu0 %v68
    %413 = vmatprep.subr.mxu0 %v71
    %414 = vmatpush1.msra.mxu0 %v70
    %415 = vmatprep.subr.mxu0 0.0
    %416 = vmatpush1.msra.mxu0 0.0
    %417 = vmatprep.subr.mxu0 0.0
    %418 = vmatpush1.msra.mxu0 0.0
    %419 = vmatprep.subr.mxu0 0.0
    %420 = vmatpush1.msra.mxu0 0.0
    %421 = vmatprep.subr.mxu0 0.0
    %422 = vmatpush1.msra.mxu0 0.0
    %423 = vmatprep.subr.mxu0 0.0
    %424 = vmatpush1.msra.mxu0 0.0
    %425 = vmatprep.subr.mxu0 0.0
    %426 = vmatpush1.msra.mxu0 0.0
    %427 = vmatprep.subr.mxu0 0.0
    %428 = vmatpush1.msra.mxu0 0.0
    %429 = vmatprep.subr.mxu0 0.0
    %430 = vmatpush1.msra.mxu0 0.0
    %431 = vmatprep.subr.mxu0 0.0
    %432 = vmatpush1.msra.mxu0 0.0
    %433 = vmatprep.subr.mxu0 0.0
    %434 = vmatpush1.msra.mxu0 0.0
    %435 = vmatprep.subr.mxu0 0.0
    %436 = vmatpush1.msra.mxu0 0.0
    %437 = vmatprep.subr.mxu0 0.0
    %438 = vmatpush1.msra.mxu0 0.0
    %439 = vmatprep.subr.mxu0 0.0
    %440 = vmatpush1.msra.mxu0 0.0
    %441 = vmatprep.subr.mxu0 0.0
    %442 = vmatpush1.msra.mxu0 0.0
    %443 = vmatprep.subr.mxu0 0.0
    %444 = vmatpush1.msra.mxu0 0.0
    %445 = vmatprep.subr.mxu0 0.0
    %446 = vmatpush1.msra.mxu0 0.0
    %447 = vmatprep.subr.mxu0 0.0
    %448 = vmatpush1.msra.mxu0 0.0
    %449 = vmatprep.subr.mxu0 0.0
    %450 = vmatpush1.msra.mxu0 0.0
    %451 = vmatprep.subr.mxu0 0.0
    %452 = vmatpush1.msra.mxu0 0.0
    %453 = vmatprep.subr.mxu0 0.0
    %454 = vmatpush1.msra.mxu0 0.0
    %455 = vmatprep.subr.mxu0 0.0
    %456 = vmatpush1.msra.mxu0 0.0
    %457 = vmatprep.subr.mxu0 0.0
    %458 = vmatpush1.msra.mxu0 0.0
    %459 = vmatprep.subr.mxu0 0.0
    %460 = vmatpush1.msra.mxu0 0.0
    %461 = vmatprep.subr.mxu0 0.0
    %462 = vmatpush1.msra.mxu0 0.0
    %463 = vmatprep.mubr.f32.mxu0 0.0
    %464 = vmatmul.mubr.f32.gmra.mrb[0].mxu0 %v397
    %v465 = vpop.f32.mrb[0].mxu0
    %v466 = vadd.f32 0.0, %v465
    %v467 = vpop.f32.mrb[0].mxu0
    %v468 = vadd.f32 0.0, %v467
    %469 = vdwg.mxu0
    %s470 = scalar_lea.vmem [#allocation2], 16
    %v471 = vld [vmem:[%s470] sm:$0xff]
    %v472 = vadd.f32 %v471, %v466
    %s473 = scalar_lea.vmem [#allocation2], 96
    %v474 = vld [vmem:[%s473 + $0x8] sm:$0xff]
    %v475 = vadd.f32 %v474, %v468
    %v476 = vxor.u32 %v472, 2147483648
    %v477 = vmul.f32 %v476, 1.442695
    %v478 = vpow.pop %v477
    %v479 = vadd.f32 %v478, 1.0
    %v480 = vrcp.pop %v479
    %v481 = vmul.f32 1.0, %v480
    %v482 = vtanh.pop %v472
    %v483 = vmul.f32 %v481, %v351
    %485 = vrot.lane.b32.xlu0 %v482, 32
    %v486 = vpop.permute.xlu0 %485
    %v488 = vmul.f32 %v481, %v486
    %490 = vrot.lane.b32.xlu0 %v488, 32
    %v491 = vpop.permute.xlu0 %490
    %v493 = vadd.f32 %v483, %v491
    %v494 = vtanh.pop %v493
    %496 = vrot.lane.b32.xlu0 %v494, 32
    %v497 = vpop.permute.xlu0 %496
    %v499 = vmul.f32 %v481, %v497
    %v500 = vxor.u32 %v475, 2147483648
    %v501 = vmul.f32 %v500, 1.442695
    %v502 = vpow.pop %v501
    %v503 = vadd.f32 %v502, 1.0
    %v504 = vrcp.pop %v503
    %v505 = vmul.f32 1.0, %v504
    %v506 = vtanh.pop %v475
    %v507 = vmul.f32 %v505, %v375
    %509 = vrot.lane.b32.xlu0 %v506, 32
    %v510 = vpop.permute.xlu0 %509
    %v512 = vmul.f32 %v505, %v510
    %514 = vrot.lane.b32.xlu0 %v512, 32
    %v515 = vpop.permute.xlu0 %514
    %v517 = vadd.f32 %v507, %v515
    %v518 = vtanh.pop %v517
    %520 = vrot.lane.b32.xlu0 %v518, 32
    %v521 = vpop.permute.xlu0 %520
    %v523 = vmul.f32 %v505, %v521
    %525 = vrot.lane.b32.xlu0 %v499, 64
    %v526 = vpop.permute.xlu0 %525
    %s528 = scalar_lea.vmem [#allocation3], 8
    %529 = vst.msk [vmem:[%s528] sm:$0xff] %vm386, %v526
    %531 = vrot.lane.b32.xlu0 %v523, 96
    %v532 = vpop.permute.xlu0 %531
    %s534 = scalar_lea.vmem [#allocation3], 48
    %535 = vst.msk [vmem:[%s534] sm:$0xff] %vm393, %v532
    %v536 = vsel %vm386, %v526, %v532
    %v538 = vsel %vm254, %v536, 0
    %540 = vmatprep.subr.mxu0 %v57
    %541 = vmatpush1.msra.mxu0 %v56
    %542 = vmatprep.subr.mxu0 %v59
    %543 = vmatpush1.msra.mxu0 %v58
    %544 = vmatprep.subr.mxu0 %v61
    %545 = vmatpush1.msra.mxu0 %v60
    %546 = vmatprep.subr.mxu0 %v63
    %547 = vmatpush1.msra.mxu0 %v62
    %548 = vmatprep.subr.mxu0 %v65
    %549 = vmatpush1.msra.mxu0 %v64
    %550 = vmatprep.subr.mxu0 %v67
    %551 = vmatpush1.msra.mxu0 %v66
    %552 = vmatprep.subr.mxu0 %v69
    %553 = vmatpush1.msra.mxu0 %v68
    %554 = vmatprep.subr.mxu0 %v71
    %555 = vmatpush1.msra.mxu0 %v70
    %556 = vmatprep.subr.mxu0 0.0
    %557 = vmatpush1.msra.mxu0 0.0
    %558 = vmatprep.subr.mxu0 0.0
    %559 = vmatpush1.msra.mxu0 0.0
    %560 = vmatprep.subr.mxu0 0.0
    %561 = vmatpush1.msra.mxu0 0.0
    %562 = vmatprep.subr.mxu0 0.0
    %563 = vmatpush1.msra.mxu0 0.0
    %564 = vmatprep.subr.mxu0 0.0
    %565 = vmatpush1.msra.mxu0 0.0
    %566 = vmatprep.subr.mxu0 0.0
    %567 = vmatpush1.msra.mxu0 0.0
    %568 = vmatprep.subr.mxu0 0.0
    %569 = vmatpush1.msra.mxu0 0.0
    %570 = vmatprep.subr.mxu0 0.0
    %571 = vmatpush1.msra.mxu0 0.0
    %572 = vmatprep.subr.mxu0 0.0
    %573 = vmatpush1.msra.mxu0 0.0
    %574 = vmatprep.subr.mxu0 0.0
    %575 = vmatpush1.msra.mxu0 0.0
    %576 = vmatprep.subr.mxu0 0.0
    %577 = vmatpush1.msra.mxu0 0.0
    %578 = vmatprep.subr.mxu0 0.0
    %579 = vmatpush1.msra.mxu0 0.0
    %580 = vmatprep.subr.mxu0 0.0
    %581 = vmatpush1.msra.mxu0 0.0
    %582 = vmatprep.subr.mxu0 0.0
    %583 = vmatpush1.msra.mxu0 0.0
    %584 = vmatprep.subr.mxu0 0.0
    %585 = vmatpush1.msra.mxu0 0.0
    %586 = vmatprep.subr.mxu0 0.0
    %587 = vmatpush1.msra.mxu0 0.0
    %588 = vmatprep.subr.mxu0 0.0
    %589 = vmatpush1.msra.mxu0 0.0
    %590 = vmatprep.subr.mxu0 0.0
    %591 = vmatpush1.msra.mxu0 0.0
    %592 = vmatprep.subr.mxu0 0.0
    %593 = vmatpush1.msra.mxu0 0.0
    %594 = vmatprep.subr.mxu0 0.0
    %595 = vmatpush1.msra.mxu0 0.0
    %596 = vmatprep.subr.mxu0 0.0
    %597 = vmatpush1.msra.mxu0 0.0
    %598 = vmatprep.subr.mxu0 0.0
    %599 = vmatpush1.msra.mxu0 0.0
    %600 = vmatprep.subr.mxu0 0.0
    %601 = vmatpush1.msra.mxu0 0.0
    %602 = vmatprep.subr.mxu0 0.0
    %603 = vmatpush1.msra.mxu0 0.0
    %604 = vmatprep.mubr.f32.mxu0 0.0
    %605 = vmatmul.mubr.f32.gmra.mrb[0].mxu0 %v538
    %v606 = vpop.f32.mrb[0].mxu0
    %v607 = vadd.f32 0.0, %v606
    %v608 = vpop.f32.mrb[0].mxu0
    %v609 = vadd.f32 0.0, %v608
    %610 = vdwg.mxu0
    %s611 = scalar_lea.vmem [#allocation2], 32
    %v612 = vld [vmem:[%s611] sm:$0xff]
    %v613 = vadd.f32 %v612, %v607
    %s614 = scalar_lea.vmem [#allocation2], 80
    %v615 = vld [vmem:[%s614 + $0x8] sm:$0xff]
    %v616 = vadd.f32 %v615, %v609
    %v617 = vxor.u32 %v613, 2147483648
    %v618 = vmul.f32 %v617, 1.442695
    %v619 = vpow.pop %v618
    %v620 = vadd.f32 %v619, 1.0
    %v621 = vrcp.pop %v620
    %v622 = vmul.f32 1.0, %v621
    %v623 = vtanh.pop %v613
    %v624 = vmul.f32 %v622, %v493
    %626 = vrot.lane.b32.xlu0 %v623, 32
    %v627 = vpop.permute.xlu0 %626
    %v629 = vmul.f32 %v622, %v627
    %631 = vrot.lane.b32.xlu0 %v629, 32
    %v632 = vpop.permute.xlu0 %631
    %v634 = vadd.f32 %v624, %v632
    %v635 = vtanh.pop %v634
    %637 = vrot.lane.b32.xlu0 %v635, 32
    %v638 = vpop.permute.xlu0 %637
    %v640 = vmul.f32 %v622, %v638
    %v641 = vxor.u32 %v616, 2147483648
    %v642 = vmul.f32 %v641, 1.442695
    %v643 = vpow.pop %v642
    %v644 = vadd.f32 %v643, 1.0
    %v645 = vrcp.pop %v644
    %v646 = vmul.f32 1.0, %v645
    %v647 = vtanh.pop %v616
    %v648 = vmul.f32 %v646, %v517
    %650 = vrot.lane.b32.xlu0 %v647, 32
    %v651 = vpop.permute.xlu0 %650
    %v653 = vmul.f32 %v646, %v651
    %655 = vrot.lane.b32.xlu0 %v653, 32
    %v656 = vpop.permute.xlu0 %655
    %v658 = vadd.f32 %v648, %v656
    %v659 = vtanh.pop %v658
    %661 = vrot.lane.b32.xlu0 %v659, 32
    %v662 = vpop.permute.xlu0 %661
    %v664 = vmul.f32 %v646, %v662
    %666 = vrot.lane.b32.xlu0 %v640, 64
    %v667 = vpop.permute.xlu0 %666
    %s669 = scalar_lea.vmem [#allocation3], 16
    %670 = vst.msk [vmem:[%s669] sm:$0xff] %vm386, %v667
    %672 = vrot.lane.b32.xlu0 %v664, 96
    %v673 = vpop.permute.xlu0 %672
    %s675 = scalar_lea.vmem [#allocation3], 40
    %676 = vst.msk [vmem:[%s675] sm:$0xff] %vm393, %v673
    %v677 = vsel %vm386, %v667, %v673
    %v679 = vsel %vm254, %v677, 0
    %681 = vmatprep.subr.mxu0 %v57
    %682 = vmatpush1.msra.mxu0 %v56
    %683 = vmatprep.subr.mxu0 %v59
    %684 = vmatpush1.msra.mxu0 %v58
    %685 = vmatprep.subr.mxu0 %v61
    %686 = vmatpush1.msra.mxu0 %v60
    %687 = vmatprep.subr.mxu0 %v63
    %688 = vmatpush1.msra.mxu0 %v62
    %689 = vmatprep.subr.mxu0 %v65
    %690 = vmatpush1.msra.mxu0 %v64
    %691 = vmatprep.subr.mxu0 %v67
    %692 = vmatpush1.msra.mxu0 %v66
    %693 = vmatprep.subr.mxu0 %v69
    %694 = vmatpush1.msra.mxu0 %v68
    %695 = vmatprep.subr.mxu0 %v71
    %696 = vmatpush1.msra.mxu0 %v70
    %697 = vmatprep.subr.mxu0 0.0
    %698 = vmatpush1.msra.mxu0 0.0
    %699 = vmatprep.subr.mxu0 0.0
    %700 = vmatpush1.msra.mxu0 0.0
    %701 = vmatprep.subr.mxu0 0.0
    %702 = vmatpush1.msra.mxu0 0.0
    %703 = vmatprep.subr.mxu0 0.0
    %704 = vmatpush1.msra.mxu0 0.0
    %705 = vmatprep.subr.mxu0 0.0
    %706 = vmatpush1.msra.mxu0 0.0
    %707 = vmatprep.subr.mxu0 0.0
    %708 = vmatpush1.msra.mxu0 0.0
    %709 = vmatprep.subr.mxu0 0.0
    %710 = vmatpush1.msra.mxu0 0.0
    %711 = vmatprep.subr.mxu0 0.0
    %712 = vmatpush1.msra.mxu0 0.0
    %713 = vmatprep.subr.mxu0 0.0
    %714 = vmatpush1.msra.mxu0 0.0
    %715 = vmatprep.subr.mxu0 0.0
    %716 = vmatpush1.msra.mxu0 0.0
    %717 = vmatprep.subr.mxu0 0.0
    %718 = vmatpush1.msra.mxu0 0.0
    %719 = vmatprep.subr.mxu0 0.0
    %720 = vmatpush1.msra.mxu0 0.0
    %721 = vmatprep.subr.mxu0 0.0
    %722 = vmatpush1.msra.mxu0 0.0
    %723 = vmatprep.subr.mxu0 0.0
    %724 = vmatpush1.msra.mxu0 0.0
    %725 = vmatprep.subr.mxu0 0.0
    %726 = vmatpush1.msra.mxu0 0.0
    %727 = vmatprep.subr.mxu0 0.0
    %728 = vmatpush1.msra.mxu0 0.0
    %729 = vmatprep.subr.mxu0 0.0
    %730 = vmatpush1.msra.mxu0 0.0
    %731 = vmatprep.subr.mxu0 0.0
    %732 = vmatpush1.msra.mxu0 0.0
    %733 = vmatprep.subr.mxu0 0.0
    %734 = vmatpush1.msra.mxu0 0.0
    %735 = vmatprep.subr.mxu0 0.0
    %736 = vmatpush1.msra.mxu0 0.0
    %737 = vmatprep.subr.mxu0 0.0
    %738 = vmatpush1.msra.mxu0 0.0
    %739 = vmatprep.subr.mxu0 0.0
    %740 = vmatpush1.msra.mxu0 0.0
    %741 = vmatprep.subr.mxu0 0.0
    %742 = vmatpush1.msra.mxu0 0.0
    %743 = vmatprep.subr.mxu0 0.0
    %744 = vmatpush1.msra.mxu0 0.0
    %745 = vmatprep.mubr.f32.mxu0 0.0
    %746 = vmatmul.mubr.f32.gmra.mrb[0].mxu0 %v679
    %v747 = vpop.f32.mrb[0].mxu0
    %v748 = vadd.f32 0.0, %v747
    %v749 = vpop.f32.mrb[0].mxu0
    %v750 = vadd.f32 0.0, %v749
    %751 = vdwg.mxu0
    %s752 = scalar_lea.vmem [#allocation2], 48
    %v753 = vld [vmem:[%s752] sm:$0xff]
    %v754 = vadd.f32 %v753, %v748
    %s755 = scalar_lea.vmem [#allocation2], 64
    %v756 = vld [vmem:[%s755 + $0x8] sm:$0xff]
    %v757 = vadd.f32 %v756, %v750
    %v758 = vxor.u32 %v754, 2147483648
    %v759 = vmul.f32 %v758, 1.442695
    %v760 = vpow.pop %v759
    %v761 = vadd.f32 %v760, 1.0
    %v762 = vrcp.pop %v761
    %v763 = vmul.f32 1.0, %v762
    %v764 = vtanh.pop %v754
    %v765 = vmul.f32 %v763, %v634
    %767 = vrot.lane.b32.xlu0 %v764, 32
    %v768 = vpop.permute.xlu0 %767
    %v770 = vmul.f32 %v763, %v768
    %772 = vrot.lane.b32.xlu0 %v770, 32
    %v773 = vpop.permute.xlu0 %772
    %v775 = vadd.f32 %v765, %v773
    %v776 = vtanh.pop %v775
    %778 = vrot.lane.b32.xlu0 %v776, 32
    %v779 = vpop.permute.xlu0 %778
    %v781 = vmul.f32 %v763, %v779
    %v782 = vxor.u32 %v757, 2147483648
    %v783 = vmul.f32 %v782, 1.442695
    %v784 = vpow.pop %v783
    %v785 = vadd.f32 %v784, 1.0
    %v786 = vrcp.pop %v785
    %v787 = vmul.f32 1.0, %v786
    %v788 = vtanh.pop %v757
    %v789 = vmul.f32 %v787, %v658
    %791 = vrot.lane.b32.xlu0 %v788, 32
    %v792 = vpop.permute.xlu0 %791
    %v794 = vmul.f32 %v787, %v792
    %796 = vrot.lane.b32.xlu0 %v794, 32
    %v797 = vpop.permute.xlu0 %796
    %v799 = vadd.f32 %v789, %v797
    %v800 = vtanh.pop %v799
    %802 = vrot.lane.b32.xlu0 %v800, 32
    %v803 = vpop.permute.xlu0 %802
    %v805 = vmul.f32 %v787, %v803
    %807 = vrot.lane.b32.xlu0 %v781, 64
    %v808 = vpop.permute.xlu0 %807
    %s810 = scalar_lea.vmem [#allocation3], 24
    %811 = vst.msk [vmem:[%s810] sm:$0xff] %vm386, %v808
    %813 = vrot.lane.b32.xlu0 %v805, 96
    %v814 = vpop.permute.xlu0 %813
    %s816 = scalar_lea.vmem [#allocation3], 32
    %817 = vst.msk [vmem:[%s816] sm:$0xff] %vm393, %v814
    %v818 = vsel %vm386, %v808, %v814
    %v820 = vsel %vm254, %v818, 0
    %822 = vmatprep.subr.mxu0 %v57
    %823 = vmatpush1.msra.mxu0 %v56
    %824 = vmatprep.subr.mxu0 %v59
    %825 = vmatpush1.msra.mxu0 %v58
    %826 = vmatprep.subr.mxu0 %v61
    %827 = vmatpush1.msra.mxu0 %v60
    %828 = vmatprep.subr.mxu0 %v63
    %829 = vmatpush1.msra.mxu0 %v62
    %830 = vmatprep.subr.mxu0 %v65
    %831 = vmatpush1.msra.mxu0 %v64
    %832 = vmatprep.subr.mxu0 %v67
    %833 = vmatpush1.msra.mxu0 %v66
    %834 = vmatprep.subr.mxu0 %v69
    %835 = vmatpush1.msra.mxu0 %v68
    %836 = vmatprep.subr.mxu0 %v71
    %837 = vmatpush1.msra.mxu0 %v70
    %838 = vmatprep.subr.mxu0 0.0
    %839 = vmatpush1.msra.mxu0 0.0
    %840 = vmatprep.subr.mxu0 0.0
    %841 = vmatpush1.msra.mxu0 0.0
    %842 = vmatprep.subr.mxu0 0.0
    %843 = vmatpush1.msra.mxu0 0.0
    %844 = vmatprep.subr.mxu0 0.0
    %845 = vmatpush1.msra.mxu0 0.0
    %846 = vmatprep.subr.mxu0 0.0
    %847 = vmatpush1.msra.mxu0 0.0
    %848 = vmatprep.subr.mxu0 0.0
    %849 = vmatpush1.msra.mxu0 0.0
    %850 = vmatprep.subr.mxu0 0.0
    %851 = vmatpush1.msra.mxu0 0.0
    %852 = vmatprep.subr.mxu0 0.0
    %853 = vmatpush1.msra.mxu0 0.0
    %854 = vmatprep.subr.mxu0 0.0
    %855 = vmatpush1.msra.mxu0 0.0
    %856 = vmatprep.subr.mxu0 0.0
    %857 = vmatpush1.msra.mxu0 0.0
    %858 = vmatprep.subr.mxu0 0.0
    %859 = vmatpush1.msra.mxu0 0.0
    %860 = vmatprep.subr.mxu0 0.0
    %861 = vmatpush1.msra.mxu0 0.0
    %862 = vmatprep.subr.mxu0 0.0
    %863 = vmatpush1.msra.mxu0 0.0
    %864 = vmatprep.subr.mxu0 0.0
    %865 = vmatpush1.msra.mxu0 0.0
    %866 = vmatprep.subr.mxu0 0.0
    %867 = vmatpush1.msra.mxu0 0.0
    %868 = vmatprep.subr.mxu0 0.0
    %869 = vmatpush1.msra.mxu0 0.0
    %870 = vmatprep.subr.mxu0 0.0
    %871 = vmatpush1.msra.mxu0 0.0
    %872 = vmatprep.subr.mxu0 0.0
    %873 = vmatpush1.msra.mxu0 0.0
    %874 = vmatprep.subr.mxu0 0.0
    %875 = vmatpush1.msra.mxu0 0.0
    %876 = vmatprep.subr.mxu0 0.0
    %877 = vmatpush1.msra.mxu0 0.0
    %878 = vmatprep.subr.mxu0 0.0
    %879 = vmatpush1.msra.mxu0 0.0
    %880 = vmatprep.subr.mxu0 0.0
    %881 = vmatpush1.msra.mxu0 0.0
    %882 = vmatprep.subr.mxu0 0.0
    %883 = vmatpush1.msra.mxu0 0.0
    %884 = vmatprep.subr.mxu0 0.0
    %885 = vmatpush1.msra.mxu0 0.0
    %886 = vmatprep.mubr.f32.mxu0 0.0
    %887 = vmatmul.mubr.f32.gmra.mrb[0].mxu0 %v820
    %v888 = vpop.f32.mrb[0].mxu0
    %v889 = vadd.f32 0.0, %v888
    %v890 = vpop.f32.mrb[0].mxu0
    %v891 = vadd.f32 0.0, %v890
    %892 = vdwg.mxu0
    %v893 = vld [vmem:[%s755] sm:$0xff]
    %v894 = vadd.f32 %v893, %v889
    %v895 = vld [vmem:[%s752 + $0x8] sm:$0xff]
    %v896 = vadd.f32 %v895, %v891
    %v897 = vxor.u32 %v894, 2147483648
    %v898 = vmul.f32 %v897, 1.442695
    %v899 = vpow.pop %v898
    %v900 = vadd.f32 %v899, 1.0
    %v901 = vrcp.pop %v900
    %v902 = vmul.f32 1.0, %v901
    %v903 = vtanh.pop %v894
    %v904 = vmul.f32 %v902, %v775
    %906 = vrot.lane.b32.xlu0 %v903, 32
    %v907 = vpop.permute.xlu0 %906
    %v909 = vmul.f32 %v902, %v907
    %911 = vrot.lane.b32.xlu0 %v909, 32
    %v912 = vpop.permute.xlu0 %911
    %v914 = vadd.f32 %v904, %v912
    %v915 = vtanh.pop %v914
    %917 = vrot.lane.b32.xlu0 %v915, 32
    %v918 = vpop.permute.xlu0 %917
    %v920 = vmul.f32 %v902, %v918
    %v921 = vxor.u32 %v896, 2147483648
    %v922 = vmul.f32 %v921, 1.442695
    %v923 = vpow.pop %v922
    %v924 = vadd.f32 %v923, 1.0
    %v925 = vrcp.pop %v924
    %v926 = vmul.f32 1.0, %v925
    %v927 = vtanh.pop %v896
    %v928 = vmul.f32 %v926, %v799
    %930 = vrot.lane.b32.xlu0 %v927, 32
    %v931 = vpop.permute.xlu0 %930
    %v933 = vmul.f32 %v926, %v931
    %935 = vrot.lane.b32.xlu0 %v933, 32
    %v936 = vpop.permute.xlu0 %935
    %v938 = vadd.f32 %v928, %v936
    %v939 = vtanh.pop %v938
    %941 = vrot.lane.b32.xlu0 %v939, 32
    %v942 = vpop.permute.xlu0 %941
    %v944 = vmul.f32 %v926, %v942
    %946 = vrot.lane.b32.xlu0 %v920, 64
    %v947 = vpop.permute.xlu0 %946
    %949 = vst.msk [vmem:[%s816] sm:$0xff] %vm386, %v947
    %951 = vrot.lane.b32.xlu0 %v944, 96
    %v952 = vpop.permute.xlu0 %951
    %954 = vst.msk [vmem:[%s810] sm:$0xff] %vm393, %v952
    %v955 = vsel %vm386, %v947, %v952
    %v957 = vsel %vm254, %v955, 0
    %959 = vmatprep.subr.mxu0 %v57
    %960 = vmatpush1.msra.mxu0 %v56
    %961 = vmatprep.subr.mxu0 %v59
    %962 = vmatpush1.msra.mxu0 %v58
    %963 = vmatprep.subr.mxu0 %v61
    %964 = vmatpush1.msra.mxu0 %v60
    %965 = vmatprep.subr.mxu0 %v63
    %966 = vmatpush1.msra.mxu0 %v62
    %967 = vmatprep.subr.mxu0 %v65
    %968 = vmatpush1.msra.mxu0 %v64
    %969 = vmatprep.subr.mxu0 %v67
    %970 = vmatpush1.msra.mxu0 %v66
    %971 = vmatprep.subr.mxu0 %v69
    %972 = vmatpush1.msra.mxu0 %v68
    %973 = vmatprep.subr.mxu0 %v71
    %974 = vmatpush1.msra.mxu0 %v70
    %975 = vmatprep.subr.mxu0 0.0
    %976 = vmatpush1.msra.mxu0 0.0
    %977 = vmatprep.subr.mxu0 0.0
    %978 = vmatpush1.msra.mxu0 0.0
    %979 = vmatprep.subr.mxu0 0.0
    %980 = vmatpush1.msra.mxu0 0.0
    %981 = vmatprep.subr.mxu0 0.0
    %982 = vmatpush1.msra.mxu0 0.0
    %983 = vmatprep.subr.mxu0 0.0
    %984 = vmatpush1.msra.mxu0 0.0
    %985 = vmatprep.subr.mxu0 0.0
    %986 = vmatpush1.msra.mxu0 0.0
    %987 = vmatprep.subr.mxu0 0.0
    %988 = vmatpush1.msra.mxu0 0.0
    %989 = vmatprep.subr.mxu0 0.0
    %990 = vmatpush1.msra.mxu0 0.0
    %991 = vmatprep.subr.mxu0 0.0
    %992 = vmatpush1.msra.mxu0 0.0
    %993 = vmatprep.subr.mxu0 0.0
    %994 = vmatpush1.msra.mxu0 0.0
    %995 = vmatprep.subr.mxu0 0.0
    %996 = vmatpush1.msra.mxu0 0.0
    %997 = vmatprep.subr.mxu0 0.0
    %998 = vmatpush1.msra.mxu0 0.0
    %999 = vmatprep.subr.mxu0 0.0
    %1000 = vmatpush1.msra.mxu0 0.0
    %1001 = vmatprep.subr.mxu0 0.0
    %1002 = vmatpush1.msra.mxu0 0.0
    %1003 = vmatprep.subr.mxu0 0.0
    %1004 = vmatpush1.msra.mxu0 0.0
    %1005 = vmatprep.subr.mxu0 0.0
    %1006 = vmatpush1.msra.mxu0 0.0
    %1007 = vmatprep.subr.mxu0 0.0
    %1008 = vmatpush1.msra.mxu0 0.0
    %1009 = vmatprep.subr.mxu0 0.0
    %1010 = vmatpush1.msra.mxu0 0.0
    %1011 = vmatprep.subr.mxu0 0.0
    %1012 = vmatpush1.msra.mxu0 0.0
    %1013 = vmatprep.subr.mxu0 0.0
    %1014 = vmatpush1.msra.mxu0 0.0
    %1015 = vmatprep.subr.mxu0 0.0
    %1016 = vmatpush1.msra.mxu0 0.0
    %1017 = vmatprep.subr.mxu0 0.0
    %1018 = vmatpush1.msra.mxu0 0.0
    %1019 = vmatprep.subr.mxu0 0.0
    %1020 = vmatpush1.msra.mxu0 0.0
    %1021 = vmatprep.subr.mxu0 0.0
    %1022 = vmatpush1.msra.mxu0 0.0
    %1023 = vmatprep.mubr.f32.mxu0 0.0
    %1024 = vmatmul.mubr.f32.gmra.mrb[0].mxu0 %v957
    %v1025 = vpop.f32.mrb[0].mxu0
    %v1026 = vadd.f32 0.0, %v1025
    %v1027 = vpop.f32.mrb[0].mxu0
    %v1028 = vadd.f32 0.0, %v1027
    %1029 = vdwg.mxu0
    %v1030 = vld [vmem:[%s614] sm:$0xff]
    %v1031 = vadd.f32 %v1030, %v1026
    %v1032 = vld [vmem:[%s611 + $0x8] sm:$0xff]
    %v1033 = vadd.f32 %v1032, %v1028
    %v1034 = vxor.u32 %v1031, 2147483648
    %v1035 = vmul.f32 %v1034, 1.442695
    %v1036 = vpow.pop %v1035
    %v1037 = vadd.f32 %v1036, 1.0
    %v1038 = vrcp.pop %v1037
    %v1039 = vmul.f32 1.0, %v1038
    %v1040 = vtanh.pop %v1031
    %v1041 = vmul.f32 %v1039, %v914
    %1043 = vrot.lane.b32.xlu0 %v1040, 32
    %v1044 = vpop.permute.xlu0 %1043
    %v1046 = vmul.f32 %v1039, %v1044
    %1048 = vrot.lane.b32.xlu0 %v1046, 32
    %v1049 = vpop.permute.xlu0 %1048
    %v1051 = vadd.f32 %v1041, %v1049
    %v1052 = vtanh.pop %v1051
    %1054 = vrot.lane.b32.xlu0 %v1052, 32
    %v1055 = vpop.permute.xlu0 %1054
    %v1057 = vmul.f32 %v1039, %v1055
    %v1058 = vxor.u32 %v1033, 2147483648
    %v1059 = vmul.f32 %v1058, 1.442695
    %v1060 = vpow.pop %v1059
    %v1061 = vadd.f32 %v1060, 1.0
    %v1062 = vrcp.pop %v1061
    %v1063 = vmul.f32 1.0, %v1062
    %v1064 = vtanh.pop %v1033
    %v1065 = vmul.f32 %v1063, %v938
    %1067 = vrot.lane.b32.xlu0 %v1064, 32
    %v1068 = vpop.permute.xlu0 %1067
    %v1070 = vmul.f32 %v1063, %v1068
    %1072 = vrot.lane.b32.xlu0 %v1070, 32
    %v1073 = vpop.permute.xlu0 %1072
    %v1075 = vadd.f32 %v1065, %v1073
    %v1076 = vtanh.pop %v1075
    %1078 = vrot.lane.b32.xlu0 %v1076, 32
    %v1079 = vpop.permute.xlu0 %1078
    %v1081 = vmul.f32 %v1063, %v1079
    %1083 = vrot.lane.b32.xlu0 %v1057, 64
    %v1084 = vpop.permute.xlu0 %1083
    %1086 = vst.msk [vmem:[%s675] sm:$0xff] %vm386, %v1084
    %1088 = vrot.lane.b32.xlu0 %v1081, 96
    %v1089 = vpop.permute.xlu0 %1088
    %1091 = vst.msk [vmem:[%s669] sm:$0xff] %vm393, %v1089
    %v1092 = vsel %vm386, %v1084, %v1089
    %v1094 = vsel %vm254, %v1092, 0
    %1096 = vmatprep.subr.mxu0 %v57
    %1097 = vmatpush1.msra.mxu0 %v56
    %1098 = vmatprep.subr.mxu0 %v59
    %1099 = vmatpush1.msra.mxu0 %v58
    %1100 = vmatprep.subr.mxu0 %v61
    %1101 = vmatpush1.msra.mxu0 %v60
    %1102 = vmatprep.subr.mxu0 %v63
    %1103 = vmatpush1.msra.mxu0 %v62
    %1104 = vmatprep.subr.mxu0 %v65
    %1105 = vmatpush1.msra.mxu0 %v64
    %1106 = vmatprep.subr.mxu0 %v67
    %1107 = vmatpush1.msra.mxu0 %v66
    %1108 = vmatprep.subr.mxu0 %v69
    %1109 = vmatpush1.msra.mxu0 %v68
    %1110 = vmatprep.subr.mxu0 %v71
    %1111 = vmatpush1.msra.mxu0 %v70
    %1112 = vmatprep.subr.mxu0 0.0
    %1113 = vmatpush1.msra.mxu0 0.0
    %1114 = vmatprep.subr.mxu0 0.0
    %1115 = vmatpush1.msra.mxu0 0.0
    %1116 = vmatprep.subr.mxu0 0.0
    %1117 = vmatpush1.msra.mxu0 0.0
    %1118 = vmatprep.subr.mxu0 0.0
    %1119 = vmatpush1.msra.mxu0 0.0
    %1120 = vmatprep.subr.mxu0 0.0
    %1121 = vmatpush1.msra.mxu0 0.0
    %1122 = vmatprep.subr.mxu0 0.0
    %1123 = vmatpush1.msra.mxu0 0.0
    %1124 = vmatprep.subr.mxu0 0.0
    %1125 = vmatpush1.msra.mxu0 0.0
    %1126 = vmatprep.subr.mxu0 0.0
    %1127 = vmatpush1.msra.mxu0 0.0
    %1128 = vmatprep.subr.mxu0 0.0
    %1129 = vmatpush1.msra.mxu0 0.0
    %1130 = vmatprep.subr.mxu0 0.0
    %1131 = vmatpush1.msra.mxu0 0.0
    %1132 = vmatprep.subr.mxu0 0.0
    %1133 = vmatpush1.msra.mxu0 0.0
    %1134 = vmatprep.subr.mxu0 0.0
    %1135 = vmatpush1.msra.mxu0 0.0
    %1136 = vmatprep.subr.mxu0 0.0
    %1137 = vmatpush1.msra.mxu0 0.0
    %1138 = vmatprep.subr.mxu0 0.0
    %1139 = vmatpush1.msra.mxu0 0.0
    %1140 = vmatprep.subr.mxu0 0.0
    %1141 = vmatpush1.msra.mxu0 0.0
    %1142 = vmatprep.subr.mxu0 0.0
    %1143 = vmatpush1.msra.mxu0 0.0
    %1144 = vmatprep.subr.mxu0 0.0
    %1145 = vmatpush1.msra.mxu0 0.0
    %1146 = vmatprep.subr.mxu0 0.0
    %1147 = vmatpush1.msra.mxu0 0.0
    %1148 = vmatprep.subr.mxu0 0.0
    %1149 = vmatpush1.msra.mxu0 0.0
    %1150 = vmatprep.subr.mxu0 0.0
    %1151 = vmatpush1.msra.mxu0 0.0
    %1152 = vmatprep.subr.mxu0 0.0
    %1153 = vmatpush1.msra.mxu0 0.0
    %1154 = vmatprep.subr.mxu0 0.0
    %1155 = vmatpush1.msra.mxu0 0.0
    %1156 = vmatprep.subr.mxu0 0.0
    %1157 = vmatpush1.msra.mxu0 0.0
    %1158 = vmatprep.subr.mxu0 0.0
    %1159 = vmatpush1.msra.mxu0 0.0
    %1160 = vmatprep.mubr.f32.mxu0 0.0
    %1161 = vmatmul.mubr.f32.gmra.mrb[0].mxu0 %v1094
    %v1162 = vpop.f32.mrb[0].mxu0
    %v1163 = vadd.f32 0.0, %v1162
    %v1164 = vpop.f32.mrb[0].mxu0
    %v1165 = vadd.f32 0.0, %v1164
    %1166 = vdwg.mxu0
    %v1167 = vld [vmem:[%s473] sm:$0xff]
    %v1168 = vadd.f32 %v1167, %v1163
    %v1169 = vld [vmem:[%s470 + $0x8] sm:$0xff]
    %v1170 = vadd.f32 %v1169, %v1165
    %v1171 = vxor.u32 %v1168, 2147483648
    %v1172 = vmul.f32 %v1171, 1.442695
    %v1173 = vpow.pop %v1172
    %v1174 = vadd.f32 %v1173, 1.0
    %v1175 = vrcp.pop %v1174
    %v1176 = vmul.f32 1.0, %v1175
    %v1177 = vtanh.pop %v1168
    %v1178 = vmul.f32 %v1176, %v1051
    %1180 = vrot.lane.b32.xlu0 %v1177, 32
    %v1181 = vpop.permute.xlu0 %1180
    %v1183 = vmul.f32 %v1176, %v1181
    %1185 = vrot.lane.b32.xlu0 %v1183, 32
    %v1186 = vpop.permute.xlu0 %1185
    %v1188 = vadd.f32 %v1178, %v1186
    %v1189 = vtanh.pop %v1188
    %1191 = vrot.lane.b32.xlu0 %v1189, 32
    %v1192 = vpop.permute.xlu0 %1191
    %v1194 = vmul.f32 %v1176, %v1192
    %v1195 = vxor.u32 %v1170, 2147483648
    %v1196 = vmul.f32 %v1195, 1.442695
    %v1197 = vpow.pop %v1196
    %v1198 = vadd.f32 %v1197, 1.0
    %v1199 = vrcp.pop %v1198
    %v1200 = vmul.f32 1.0, %v1199
    %v1201 = vtanh.pop %v1170
    %v1202 = vmul.f32 %v1200, %v1075
    %1204 = vrot.lane.b32.xlu0 %v1201, 32
    %v1205 = vpop.permute.xlu0 %1204
    %v1207 = vmul.f32 %v1200, %v1205
    %1209 = vrot.lane.b32.xlu0 %v1207, 32
    %v1210 = vpop.permute.xlu0 %1209
    %v1212 = vadd.f32 %v1202, %v1210
    %v1213 = vtanh.pop %v1212
    %1215 = vrot.lane.b32.xlu0 %v1213, 32
    %v1216 = vpop.permute.xlu0 %1215
    %v1218 = vmul.f32 %v1200, %v1216
    %1220 = vrot.lane.b32.xlu0 %v1194, 64
    %v1221 = vpop.permute.xlu0 %1220
    %1223 = vst.msk [vmem:[%s534] sm:$0xff] %vm386, %v1221
    %1225 = vrot.lane.b32.xlu0 %v1218, 96
    %v1226 = vpop.permute.xlu0 %1225
    %1228 = vst.msk [vmem:[%s528] sm:$0xff] %vm393, %v1226
    %v1229 = vsel %vm386, %v1221, %v1226
    %v1231 = vsel %vm254, %v1229, 0
    %1233 = vmatprep.subr.mxu0 %v57
    %1234 = vmatpush1.msra.mxu0 %v56
    %1235 = vmatprep.subr.mxu0 %v59
    %1236 = vmatpush1.msra.mxu0 %v58
    %1237 = vmatprep.subr.mxu0 %v61
    %1238 = vmatpush1.msra.mxu0 %v60
    %1239 = vmatprep.subr.mxu0 %v63
    %1240 = vmatpush1.msra.mxu0 %v62
    %1241 = vmatprep.subr.mxu0 %v65
    %1242 = vmatpush1.msra.mxu0 %v64
    %1243 = vmatprep.subr.mxu0 %v67
    %1244 = vmatpush1.msra.mxu0 %v66
    %1245 = vmatprep.subr.mxu0 %v69
    %1246 = vmatpush1.msra.mxu0 %v68
    %1247 = vmatprep.subr.mxu0 %v71
    %1248 = vmatpush1.msra.mxu0 %v70
    %1249 = vmatprep.subr.mxu0 0.0
    %1250 = vmatpush1.msra.mxu0 0.0
    %1251 = vmatprep.subr.mxu0 0.0
    %1252 = vmatpush1.msra.mxu0 0.0
    %1253 = vmatprep.subr.mxu0 0.0
    %1254 = vmatpush1.msra.mxu0 0.0
    %1255 = vmatprep.subr.mxu0 0.0
    %1256 = vmatpush1.msra.mxu0 0.0
    %1257 = vmatprep.subr.mxu0 0.0
    %1258 = vmatpush1.msra.mxu0 0.0
    %1259 = vmatprep.subr.mxu0 0.0
    %1260 = vmatpush1.msra.mxu0 0.0
    %1261 = vmatprep.subr.mxu0 0.0
    %1262 = vmatpush1.msra.mxu0 0.0
    %1263 = vmatprep.subr.mxu0 0.0
    %1264 = vmatpush1.msra.mxu0 0.0
    %1265 = vmatprep.subr.mxu0 0.0
    %1266 = vmatpush1.msra.mxu0 0.0
    %1267 = vmatprep.subr.mxu0 0.0
    %1268 = vmatpush1.msra.mxu0 0.0
    %1269 = vmatprep.subr.mxu0 0.0
    %1270 = vmatpush1.msra.mxu0 0.0
    %1271 = vmatprep.subr.mxu0 0.0
    %1272 = vmatpush1.msra.mxu0 0.0
    %1273 = vmatprep.subr.mxu0 0.0
    %1274 = vmatpush1.msra.mxu0 0.0
    %1275 = vmatprep.subr.mxu0 0.0
    %1276 = vmatpush1.msra.mxu0 0.0
    %1277 = vmatprep.subr.mxu0 0.0
    %1278 = vmatpush1.msra.mxu0 0.0
    %1279 = vmatprep.subr.mxu0 0.0
    %1280 = vmatpush1.msra.mxu0 0.0
    %1281 = vmatprep.subr.mxu0 0.0
    %1282 = vmatpush1.msra.mxu0 0.0
    %1283 = vmatprep.subr.mxu0 0.0
    %1284 = vmatpush1.msra.mxu0 0.0
    %1285 = vmatprep.subr.mxu0 0.0
    %1286 = vmatpush1.msra.mxu0 0.0
    %1287 = vmatprep.subr.mxu0 0.0
    %1288 = vmatpush1.msra.mxu0 0.0
    %1289 = vmatprep.subr.mxu0 0.0
    %1290 = vmatpush1.msra.mxu0 0.0
    %1291 = vmatprep.subr.mxu0 0.0
    %1292 = vmatpush1.msra.mxu0 0.0
    %1293 = vmatprep.subr.mxu0 0.0
    %1294 = vmatpush1.msra.mxu0 0.0
    %1295 = vmatprep.subr.mxu0 0.0
    %1296 = vmatpush1.msra.mxu0 0.0
    %1297 = vmatprep.mubr.f32.mxu0 0.0
    %1298 = vmatmul.mubr.f32.gmra.mrb[0].mxu0 %v1231
    %v1299 = vpop.f32.mrb[0].mxu0
    %v1300 = vadd.f32 0.0, %v1299
    %v1301 = vpop.f32.mrb[0].mxu0
    %v1302 = vadd.f32 0.0, %v1301
    %1303 = vdwg.mxu0
    %v1304 = vld [vmem:[%s331] sm:$0xff]
    %v1305 = vadd.f32 %v1304, %v1300
    %v1306 = vld [vmem:[#allocation2 + $0x8] sm:$0xff]
    %v1307 = vadd.f32 %v1306, %v1302
    %v1308 = vxor.u32 %v1305, 2147483648
    %v1309 = vmul.f32 %v1308, 1.442695
    %v1310 = vpow.pop %v1309
    %v1311 = vadd.f32 %v1310, 1.0
    %v1312 = vrcp.pop %v1311
    %v1313 = vmul.f32 1.0, %v1312
    %v1314 = vtanh.pop %v1305
    %v1315 = vmul.f32 %v1313, %v1188
    %1317 = vrot.lane.b32.xlu0 %v1314, 32
    %v1318 = vpop.permute.xlu0 %1317
    %v1320 = vmul.f32 %v1313, %v1318
    %1322 = vrot.lane.b32.xlu0 %v1320, 32
    %v1323 = vpop.permute.xlu0 %1322
    %v1325 = vadd.f32 %v1315, %v1323
    %v1326 = vtanh.pop %v1325
    %1328 = vrot.lane.b32.xlu0 %v1326, 32
    %v1329 = vpop.permute.xlu0 %1328
    %v1331 = vmul.f32 %v1313, %v1329
    %v1332 = vxor.u32 %v1307, 2147483648
    %v1333 = vmul.f32 %v1332, 1.442695
    %v1334 = vpow.pop %v1333
    %v1335 = vadd.f32 %v1334, 1.0
    %v1336 = vrcp.pop %v1335
    %v1337 = vmul.f32 1.0, %v1336
    %v1338 = vtanh.pop %v1307
    %v1339 = vmul.f32 %v1337, %v1212
    %1341 = vrot.lane.b32.xlu0 %v1338, 32
    %v1342 = vpop.permute.xlu0 %1341
    %v1344 = vmul.f32 %v1337, %v1342
    %1346 = vrot.lane.b32.xlu0 %v1344, 32
    %v1347 = vpop.permute.xlu0 %1346
    %v1349 = vadd.f32 %v1339, %v1347
    %v1350 = vtanh.pop %v1349
    %1352 = vrot.lane.b32.xlu0 %v1350, 32
    %v1353 = vpop.permute.xlu0 %1352
    %v1355 = vmul.f32 %v1337, %v1353
    %1357 = vrot.lane.b32.xlu0 %v1331, 64
    %v1358 = vpop.permute.xlu0 %1357
    %1360 = vst.msk [vmem:[%s392] sm:$0xff] %vm386, %v1358
    %1362 = vrot.lane.b32.xlu0 %v1355, 96
    %v1363 = vpop.permute.xlu0 %1362
    %1365 = vst.msk [vmem:[#allocation3] sm:$0xff] %vm393, %v1363
    %v1366 = vld [vmem:[#allocation3] sm:$0xff]
    %v1367 = vld [vmem:[#allocation3 + $0x8] sm:$0xff]
    %v1368 = vld [vmem:[#allocation3 + $0x10] sm:$0xff]
    %v1369 = vld [vmem:[#allocation3 + $0x18] sm:$0xff]
    %v1370 = vld [vmem:[#allocation3 + $0x20] sm:$0xff]
    %v1371 = vld [vmem:[#allocation3 + $0x28] sm:$0xff]
    %v1372 = vld [vmem:[#allocation3 + $0x30] sm:$0xff]
    %v1373 = vld [vmem:[#allocation3 + $0x38] sm:$0xff]
    %v1374 = vld [vmem:[%s5] sm:$0x1]
    %v1376 = vlaneseq
    %v1377 = vshrl.u32 %v1376, 7
    %v1378 = vsub.s32 0, %v1377
    %v1379 = vrot.slane %v1374, %v1378
    %v1382 = vsel %vm254, %v1366, 0
    %v1385 = vsel %vm254, %v1367, 0
    %v1388 = vsel %vm254, %v1368, 0
    %v1391 = vsel %vm254, %v1369, 0
    %v1394 = vsel %vm254, %v1370, 0
    %v1397 = vsel %vm254, %v1371, 0
    %v1400 = vsel %vm254, %v1372, 0
    %v1403 = vsel %vm254, %v1373, 0
    %1405 = vmatprep.subr.mxu0 0.0
    %1406 = vmatpush1.msra.mxu0 %v72
    %1407 = vmatprep.subr.mxu0 0.0
    %1408 = vmatpush1.msra.mxu0 %v73
    %1409 = vmatprep.subr.mxu0 0.0
    %1410 = vmatpush1.msra.mxu0 %v74
    %1411 = vmatprep.subr.mxu0 0.0
    %1412 = vmatpush1.msra.mxu0 %v75
    %1413 = vmatprep.subr.mxu0 0.0
    %1414 = vmatpush1.msra.mxu0 %v76
    %1415 = vmatprep.subr.mxu0 0.0
    %1416 = vmatpush1.msra.mxu0 %v77
    %1417 = vmatprep.subr.mxu0 0.0
    %1418 = vmatpush1.msra.mxu0 %v78
    %1419 = vmatprep.subr.mxu0 0.0
    %1420 = vmatpush1.msra.mxu0 %v79
    %1421 = vmatprep.subr.mxu0 0.0
    %1422 = vmatpush1.msra.mxu0 0.0
    %1423 = vmatprep.subr.mxu0 0.0
    %1424 = vmatpush1.msra.mxu0 0.0
    %1425 = vmatprep.subr.mxu0 0.0
    %1426 = vmatpush1.msra.mxu0 0.0
    %1427 = vmatprep.subr.mxu0 0.0
    %1428 = vmatpush1.msra.mxu0 0.0
    %1429 = vmatprep.subr.mxu0 0.0
    %1430 = vmatpush1.msra.mxu0 0.0
    %1431 = vmatprep.subr.mxu0 0.0
    %1432 = vmatpush1.msra.mxu0 0.0
    %1433 = vmatprep.subr.mxu0 0.0
    %1434 = vmatpush1.msra.mxu0 0.0
    %1435 = vmatprep.subr.mxu0 0.0
    %1436 = vmatpush1.msra.mxu0 0.0
    %1437 = vmatprep.subr.mxu0 0.0
    %1438 = vmatpush1.msra.mxu0 0.0
    %1439 = vmatprep.subr.mxu0 0.0
    %1440 = vmatpush1.msra.mxu0 0.0
    %1441 = vmatprep.subr.mxu0 0.0
    %1442 = vmatpush1.msra.mxu0 0.0
    %1443 = vmatprep.subr.mxu0 0.0
    %1444 = vmatpush1.msra.mxu0 0.0
    %1445 = vmatprep.subr.mxu0 0.0
    %1446 = vmatpush1.msra.mxu0 0.0
    %1447 = vmatprep.subr.mxu0 0.0
    %1448 = vmatpush1.msra.mxu0 0.0
    %1449 = vmatprep.subr.mxu0 0.0
    %1450 = vmatpush1.msra.mxu0 0.0
    %1451 = vmatprep.subr.mxu0 0.0
    %1452 = vmatpush1.msra.mxu0 0.0
    %1453 = vmatprep.subr.mxu0 0.0
    %1454 = vmatpush1.msra.mxu0 0.0
    %1455 = vmatprep.subr.mxu0 0.0
    %1456 = vmatpush1.msra.mxu0 0.0
    %1457 = vmatprep.subr.mxu0 0.0
    %1458 = vmatpush1.msra.mxu0 0.0
    %1459 = vmatprep.subr.mxu0 0.0
    %1460 = vmatpush1.msra.mxu0 0.0
    %1461 = vmatprep.subr.mxu0 0.0
    %1462 = vmatpush1.msra.mxu0 0.0
    %1463 = vmatprep.subr.mxu0 0.0
    %1464 = vmatpush1.msra.mxu0 0.0
    %1465 = vmatprep.subr.mxu0 0.0
    %1466 = vmatpush1.msra.mxu0 0.0
    %1467 = vmatprep.subr.mxu0 0.0
    %1468 = vmatpush1.msra.mxu0 0.0
    %1469 = vmatprep.mubr.f32.mxu0 0.0
    %1470 = vmatmul.mubr.f32.gmra.mrb[0].mxu0 %v1382
    %v1471 = vpop.f32.mrb[0].mxu0
    %v1472 = vadd.f32 %v1379, %v1471
    %v1473 = vpop.f32.mrb[0].mxu0
    %1474 = vmatprep.mubr.f32.mxu0 0.0
    %1475 = vmatmul.mubr.f32.gmra.mrb[0].mxu0 %v1385
    %v1476 = vpop.f32.mrb[0].mxu0
    %v1477 = vadd.f32 %v1379, %v1476
    %v1478 = vpop.f32.mrb[0].mxu0
    %1479 = vmatprep.mubr.f32.mxu0 0.0
    %1480 = vmatmul.mubr.f32.gmra.mrb[0].mxu0 %v1388
    %v1481 = vpop.f32.mrb[0].mxu0
    %v1482 = vadd.f32 %v1379, %v1481
    %v1483 = vpop.f32.mrb[0].mxu0
    %1484 = vmatprep.mubr.f32.mxu0 0.0
    %1485 = vmatmul.mubr.f32.gmra.mrb[0].mxu0 %v1391
    %v1486 = vpop.f32.mrb[0].mxu0
    %v1487 = vadd.f32 %v1379, %v1486
    %v1488 = vpop.f32.mrb[0].mxu0
    %1489 = vmatprep.mubr.f32.mxu0 0.0
    %1490 = vmatmul.mubr.f32.gmra.mrb[0].mxu0 %v1394
    %v1491 = vpop.f32.mrb[0].mxu0
    %v1492 = vadd.f32 %v1379, %v1491
    %v1493 = vpop.f32.mrb[0].mxu0
    %1494 = vmatprep.mubr.f32.mxu0 0.0
    %1495 = vmatmul.mubr.f32.gmra.mrb[0].mxu0 %v1397
    %v1496 = vpop.f32.mrb[0].mxu0
    %v1497 = vadd.f32 %v1379, %v1496
    %v1498 = vpop.f32.mrb[0].mxu0
    %1499 = vmatprep.mubr.f32.mxu0 0.0
    %1500 = vmatmul.mubr.f32.gmra.mrb[0].mxu0 %v1400
    %v1501 = vpop.f32.mrb[0].mxu0
    %v1502 = vadd.f32 %v1379, %v1501
    %v1503 = vpop.f32.mrb[0].mxu0
    %1504 = vmatprep.mubr.f32.mxu0 0.0
    %1505 = vmatmul.mubr.f32.gmra.mrb[0].mxu0 %v1403
    %v1506 = vpop.f32.mrb[0].mxu0
    %v1507 = vadd.f32 %v1379, %v1506
    %v1508 = vpop.f32.mrb[0].mxu0
    %1509 = vdwg.mxu0
    %vm1510 = vcmask 64512
    %1511 = vst.msk [vmem:[#allocation9] sm:$0xff] %vm1510, %v1472
    %1512 = vst.msk [vmem:[#allocation9 + $0x8] sm:$0xff] %vm1510, %v1477
    %1513 = vst.msk [vmem:[#allocation9 + $0x10] sm:$0xff] %vm1510, %v1482
    %1514 = vst.msk [vmem:[#allocation9 + $0x18] sm:$0xff] %vm1510, %v1487
    %1515 = vst.msk [vmem:[#allocation9 + $0x20] sm:$0xff] %vm1510, %v1492
    %1516 = vst.msk [vmem:[#allocation9 + $0x28] sm:$0xff] %vm1510, %v1497
    %1517 = vst.msk [vmem:[#allocation9 + $0x30] sm:$0xff] %vm1510, %v1502
    %1518 = vst.msk [vmem:[#allocation9 + $0x38] sm:$0xff] %vm1510, %v1507
    // Predicated region
    $region34: #{tpu_custom_call.1} parent=1 // pred_check
      _
    $region35: #{tpu_custom_call.1} parent=1 // pred_check_branch
      %1520 = sbr.rel (0) target = $region37
    $region36: #{tpu_custom_call.1} parent=1 // pred_region
      %s1522 = ssub.s32 1024, 1024
      %1523 = vsyncadd [#allocation6], %s1522
      %s1524 = sshll.u32 [#allocation9], 4
      %s1525 = int_to_ptr.vmem [resolvable:$true] %s1524
      %1530 = dma.vmem_to_hbm [thread:$0]  %s1525, 1024, %s6, [#allocation6], 128, 128, 8
    $region37: #{tpu_custom_call.1} parent=1 // pred_fallthru
      _
    // Predicated region
    $region38: #{tpu_custom_call.1} parent=1 // pred_check
      _
    $region39: #{tpu_custom_call.1} parent=1 // pred_check_branch
      %1532 = sbr.rel (0) target = $region41
    $region40: #{tpu_custom_call.1} parent=1 // pred_region
      %1533 = dma.done [#allocation6], 1024
    $region41: #{tpu_custom_call.1} parent=1 // pred_fallthru
      _
    %1534 = vsyncpa [#allocation5], 1
    %1535 = vsyncpa [#allocation8], 1
    %1536 = vsyncpa [#allocation6], 1

</llo_original>
